<compile_context>
chip_gen: v7x
topology: tpu7x:2x2x1
jax: 0.10.0
libtpu: 0.0.40
codegen_flags: <defaults>
</compile_context>

<pallas_src>
import math
import functools

import jax
import jax.numpy as jnp
from jax.experimental import pallas as pl
from jax.experimental.pallas import tpu as pltpu


def _mha_kernel(D, H, S, TB, compute_dtype,
                x_ref, wqkv_ref, bqkv_ref, wo_ref, bo_ref, out_ref):
    """One grid step == TB batch elements (rows = TB*S).

    x_ref    : (TB*S, D)    flattened rows of TB batch elements (row = b*S + s)
    wqkv_ref : (D, 3*H*D)   fused Q|K|V weights (in, out; head-major columns,
                            1/sqrt(D) folded into the Q columns)
    bqkv_ref : (1, 3*H*D)   fused biases (f32)
    wo_ref   : (H, D, D)    output projection, per-head (D_in, D_out) slabs
    bo_ref   : (1, D)       output bias (f32)
    out_ref  : (TB*S, D)
    """
    HD = H * D
    rows = TB * S
    x = x_ref[...]                                                # (rows, D)

    # --- Fused QKV projection: ONE lane-dense matmul (K=D, N=3*H*D). ---
    qkv = jnp.dot(x, wqkv_ref[...], preferred_element_type=jnp.float32)
    qkv = qkv + bqkv_ref[...]                                     # (rows, 3HD) f32

    # --- Split heads onto a LEADING batch axis: static lane slices +
    #     leading-dim reshape/concat only.  g = h*TB + b. ---
    def split_heads(t):                                           # (rows, HD) -> (H*TB, S, D)
        return jnp.concatenate(
            [t[:, h * D:(h + 1) * D].reshape(TB, S, D) for h in range(H)],
            axis=0)

    q = split_heads(qkv[:, 0:HD]).astype(compute_dtype)
    k = split_heads(qkv[:, HD:2 * HD]).astype(compute_dtype)
    v = split_heads(qkv[:, 2 * HD:3 * HD]).astype(compute_dtype)

    # --- ONE batched score matmul + ONE softmax over all (head, batch) pairs.
    #     Contract on D directly (no k.T materialized). ---
    s = jnp.einsum("gqd,gkd->gqk", q, k,
                   preferred_element_type=jnp.float32)            # (H*TB, S, S) f32
    s = s - jnp.max(s, axis=-1, keepdims=True)
    p = jnp.exp(s)
    p = p * pl.reciprocal(jnp.sum(p, axis=-1, keepdims=True), approx=True)

    o = jnp.einsum("gqk,gkd->gqd", p.astype(compute_dtype), v,
                   preferred_element_type=jnp.float32)            # (H*TB, S, D) f32

    # --- Output projection: one batched per-head matmul, then sum over heads
    #     (avoids concatenating H 32-lane slabs into 128 lanes). ---
    o3 = o.reshape(H, rows, D).astype(compute_dtype)              # leading-dim reshape only
    out_h = jnp.einsum("hrd,hde->hre", o3, wo_ref[...],
                       preferred_element_type=jnp.float32)        # (H, rows, D) f32
    out = jnp.sum(out_h, axis=0) + bo_ref[...]
    out_ref[...] = out.astype(out_ref.dtype)


def _num_tensorcores():
    """TensorCores per device visible to this process (v7x: 2, v5e/v6e: 1)."""
    try:
        return max(1, int(getattr(jax.devices()[0], "num_cores", 1) or 1))
    except Exception:
        return 1


def _choose_tb(B, S, num_cores):
    """Batch elements per grid step.

    Target ~512 rows/step (per-step pipeline overhead ~0.35us; big row blocks
    fill MXU sublanes).  Only split the grid across TensorCores when each core
    gets >= 256 rows; on single-TC chips the grid is a serial loop, so forcing
    grid >= 2 just halves the block size.  Row blocks must satisfy the (8,128)
    rule: TB*S % 8 == 0 unless TB == B (full-extent block is always legal).
    """
    divisors = [tb for tb in range(1, B + 1) if B % tb == 0]
    valid = [tb for tb in divisors if tb == B or (tb * S) % 8 == 0]
    if not valid:
        valid = [B]
    pool = valid
    if num_cores > 1 and B * S >= num_cores * 256:
        multi = [tb for tb in valid if B // tb >= num_cores]
        if multi:
            pool = multi
    target_tb = max(1, 512 // max(S, 1))
    under = [tb for tb in pool if tb <= target_tb]
    return max(under) if under else min(pool)


def multi_head_attention(x, params, *, D, H, compute_dtype=jnp.bfloat16):
    """x: (B, S, D) float32. params: PyTorch-convention nn.Linear weights (out, in).

    compute_dtype is the MXU-input dtype for x / weights / attention probs;
    all accumulation and the softmax remain f32.  bf16 is the default.
    """
    B, S, D_in = x.shape
    assert D_in == D
    HD = H * D
    TB = _choose_tb(B, S, _num_tensorcores())
    grid = B // TB
    rows = TB * S

    inv_sqrt_d = 1.0 / math.sqrt(D)
    # nn.Linear stores W as (out, in); y = x @ W.T + b.  Fuse Q|K|V into one
    # (D, 3*H*D) (in, out) weight, fold 1/sqrt(D) into the Q columns.
    wqkv = jnp.concatenate(
        [params["W_Q_w"].T * inv_sqrt_d, params["W_K_w"].T, params["W_V_w"].T],
        axis=1).astype(compute_dtype)                                 # (D, 3*H*D)
    bqkv = jnp.concatenate(
        [params["W_Q_b"] * inv_sqrt_d, params["W_K_b"], params["W_V_b"]],
        axis=0).reshape(1, 3 * HD).astype(jnp.float32)                # (1, 3*H*D)
    wo = params["W_O_w"].T.reshape(H, D, D).astype(compute_dtype)      # (H, D, D)
    bo = params["W_O_b"].reshape(1, D).astype(jnp.float32)             # (1, D)

    x2d = x.reshape(B * S, D).astype(compute_dtype)   # row = b*S + s (batch-major)

    flops = (2 * B * S * D * 3 * HD          # fused QKV projection
             + 2 * B * H * S * S * D         # scores
             + 2 * B * H * S * S * D         # P @ V
             + 2 * B * S * HD * D)           # output projection
    bytes_accessed = (x2d.size * x2d.dtype.itemsize
                      + wqkv.size * wqkv.dtype.itemsize
                      + bqkv.size * 4
                      + wo.size * wo.dtype.itemsize
                      + bo.size * 4
                      + B * S * D * 4)       # f32 output
    cost = pl.CostEstimate(flops=flops, transcendentals=B * H * S * S,
                           bytes_accessed=bytes_accessed)

    kernel = functools.partial(_mha_kernel, D, H, S, TB, compute_dtype)
    out2d = pl.pallas_call(
        kernel,
        out_shape=jax.ShapeDtypeStruct((B * S, D), jnp.float32),
        grid_spec=pltpu.PrefetchScalarGridSpec(
            num_scalar_prefetch=0,
            grid=(grid,),
            in_specs=[
                pl.BlockSpec((rows, D), lambda b: (b, 0)),            # x rows
                pl.BlockSpec((D, 3 * HD), lambda b: (0, 0)),          # fused Wqkv
                pl.BlockSpec((1, 3 * HD), lambda b: (0, 0)),          # fused bias
                pl.BlockSpec((H, D, D), lambda b: (0, 0, 0)),         # Wo (per-head)
                pl.BlockSpec((1, D), lambda b: (0, 0)),               # bo
            ],
            out_specs=pl.BlockSpec((rows, D), lambda b: (b, 0)),
        ),
        compiler_params=pltpu.CompilerParams(
            dimension_semantics=("parallel",)),
        cost_estimate=cost,
    )(x2d, wqkv, bqkv, wo, bo)
    return out2d.reshape(B, S, D)


def _reference(x, params, *, D, H):
    """Pure-JAX replica of the PyTorch forward, for verification."""
    B, S, _ = x.shape
    lin = lambda t, w, b: jnp.einsum("bsd,od->bso", t, w) + b
    Q = lin(x, params["W_Q_w"], params["W_Q_b"])
    K = lin(x, params["W_K_w"], params["W_K_b"])
    V = lin(x, params["W_V_w"], params["W_V_b"])
    split = lambda t: t.reshape(B, S, H, D).transpose(0, 2, 1, 3)      # (B,H,S,D)
    Q, K, V = split(Q), split(K), split(V)
    scores = jnp.einsum("bhsd,bhtd->bhst", Q, K) / math.sqrt(D)
    w = jax.nn.softmax(scores, axis=-1)
    out = jnp.einsum("bhst,bhtd->bhsd", w, V)
    out = out.transpose(0, 2, 1, 3).reshape(B, S, H * D)
    return jnp.einsum("bse,de->bsd", out, params["W_O_w"]) + params["W_O_b"]


def _init_params(key, D, H):
    """Deterministic init matching nn.Linear shapes (out, in) + uniform bounds."""
    ks = jax.random.split(key, 8)
    def linear(kw, kb, fan_in, fan_out):
        bound = 1.0 / math.sqrt(fan_in)
        w = jax.random.uniform(kw, (fan_out, fan_in), jnp.float32, -bound, bound)
        b = jax.random.uniform(kb, (fan_out,), jnp.float32, -bound, bound)
        return w, b
    p = {}
    p["W_Q_w"], p["W_Q_b"] = linear(ks[0], ks[1], D, D * H)
    p["W_K_w"], p["W_K_b"] = linear(ks[2], ks[3], D, D * H)
    p["W_V_w"], p["W_V_b"] = linear(ks[4], ks[5], D, D * H)
    p["W_O_w"], p["W_O_b"] = linear(ks[6], ks[7], D * H, D)
    return p


if __name__ == "__main__":
    B, S, D, H = 2, 8, 32, 4
    key = jax.random.PRNGKey(0)
    kx, kp = jax.random.split(key)
    x = jax.random.normal(kx, (B, S, D), jnp.float32)
    params = _init_params(kp, D, H)

    ref = _reference(x, params, D=D, H=H)

    # Default bf16 MXU-input path (DMA-bytes win on v5e; 2x MXU on v6e/v7x).
    # Softmax + all accumulation stay f32.
    out_bf16 = jax.block_until_ready(multi_head_attention(x, params, D=D, H=H))
    assert out_bf16.shape == (B, S, D)
    assert jnp.allclose(out_bf16, ref, atol=5e-2, rtol=5e-2), \
        "bf16 kernel mismatch vs reference"

    # f32 MXU-input path (exact weights; only the softmax reciprocal is approx).
    out_f32 = jax.block_until_ready(
        multi_head_attention(x, params, D=D, H=H, compute_dtype=jnp.float32))
    assert jnp.allclose(out_f32, ref, atol=2e-3, rtol=2e-3), \
        "f32 kernel mismatch vs reference"

    print("KERNEL_OK")
</pallas_src>

<mosaic_0001>
module attributes {stable_mosaic.version = 11 : i64} {
  func.func @_mha_kernel(%arg0: i32, %arg1: memref<16x32xbf16, #tpu.memory_space<vmem>>, %arg2: memref<32x384xbf16, #tpu.memory_space<vmem>>, %arg3: memref<1x384xf32, #tpu.memory_space<vmem>>, %arg4: memref<4x32x32xbf16, #tpu.memory_space<vmem>>, %arg5: memref<1x32xf32, #tpu.memory_space<vmem>>, %arg6: memref<16x32xf32, #tpu.memory_space<vmem>>) attributes {dimension_semantics = [#tpu.dimension_semantics<parallel>], iteration_bounds = array<i64: 1>, scalar_prefetch = 0 : i64, scratch_operands = 0 : i64, tpu.core_type = #tpu.core_type<tc>, window_params = [{transform_indices = @transform_0, window_bounds = array<i64: 16, 32>}, {pipeline_mode = #tpu.pipeline_mode<synchronous>, transform_indices = @transform_1, window_bounds = array<i64: 32, 384>}, {pipeline_mode = #tpu.pipeline_mode<synchronous>, transform_indices = @transform_2, window_bounds = array<i64: 1, 384>}, {pipeline_mode = #tpu.pipeline_mode<synchronous>, transform_indices = @transform_3, window_bounds = array<i64: 4, 32, 32>}, {pipeline_mode = #tpu.pipeline_mode<synchronous>, transform_indices = @transform_4, window_bounds = array<i64: 1, 32>}, {transform_indices = @transform_5, window_bounds = array<i64: 16, 32>}]} {
    %c0 = arith.constant 0 : index
    %c0_0 = arith.constant 0 : index
    %0 = vector.load %arg1[%c0, %c0_0] : memref<16x32xbf16, #tpu.memory_space<vmem>>, vector<16x32xbf16>
    %c0_1 = arith.constant 0 : index
    %c0_2 = arith.constant 0 : index
    %1 = vector.load %arg2[%c0_1, %c0_2] : memref<32x384xbf16, #tpu.memory_space<vmem>>, vector<32x384xbf16>
    %cst = arith.constant dense<0.000000e+00> : vector<16x384xf32>
    %2 = tpu.matmul %0, %1, %cst {dimension_numbers = #tpu.dot_dimension_numbers<[1], [0], [0], [1], [0, 0, 1, 1], [], []>} : vector<16x32xbf16>, vector<32x384xbf16>, vector<16x384xf32> -> vector<16x384xf32>
    %c0_3 = arith.constant 0 : index
    %c0_4 = arith.constant 0 : index
    %3 = vector.load %arg3[%c0_3, %c0_4] : memref<1x384xf32, #tpu.memory_space<vmem>>, vector<1x384xf32>
    %4 = vector.broadcast %3 : vector<1x384xf32> to vector<16x384xf32>
    %5 = arith.addf %2, %4 : vector<16x384xf32>
    %6 = vector.extract_strided_slice %5 {offsets = [0, 0], sizes = [16, 128], strides = [1, 1]} : vector<16x384xf32> to vector<16x128xf32>
    %7 = vector.extract_strided_slice %6 {offsets = [0, 0], sizes = [16, 32], strides = [1, 1]} : vector<16x128xf32> to vector<16x32xf32>
    %8 = vector.shape_cast %7 : vector<16x32xf32> to vector<2x8x32xf32>
    %9 = vector.extract_strided_slice %6 {offsets = [0, 32], sizes = [16, 32], strides = [1, 1]} : vector<16x128xf32> to vector<16x32xf32>
    %10 = vector.shape_cast %9 : vector<16x32xf32> to vector<2x8x32xf32>
    %11 = vector.extract_strided_slice %6 {offsets = [0, 64], sizes = [16, 32], strides = [1, 1]} : vector<16x128xf32> to vector<16x32xf32>
    %12 = vector.shape_cast %11 : vector<16x32xf32> to vector<2x8x32xf32>
    %13 = vector.extract_strided_slice %6 {offsets = [0, 96], sizes = [16, 32], strides = [1, 1]} : vector<16x128xf32> to vector<16x32xf32>
    %14 = vector.shape_cast %13 : vector<16x32xf32> to vector<2x8x32xf32>
    %15 = tpu.concatenate %8, %10, %12, %14 in 0 : vector<2x8x32xf32>, vector<2x8x32xf32>, vector<2x8x32xf32>, vector<2x8x32xf32> -> vector<8x8x32xf32>
    %16 = arith.truncf %15 : vector<8x8x32xf32> to vector<8x8x32xbf16>
    %17 = vector.extract_strided_slice %5 {offsets = [0, 128], sizes = [16, 128], strides = [1, 1]} : vector<16x384xf32> to vector<16x128xf32>
    %18 = vector.extract_strided_slice %17 {offsets = [0, 0], sizes = [16, 32], strides = [1, 1]} : vector<16x128xf32> to vector<16x32xf32>
    %19 = vector.shape_cast %18 : vector<16x32xf32> to vector<2x8x32xf32>
    %20 = vector.extract_strided_slice %17 {offsets = [0, 32], sizes = [16, 32], strides = [1, 1]} : vector<16x128xf32> to vector<16x32xf32>
    %21 = vector.shape_cast %20 : vector<16x32xf32> to vector<2x8x32xf32>
    %22 = vector.extract_strided_slice %17 {offsets = [0, 64], sizes = [16, 32], strides = [1, 1]} : vector<16x128xf32> to vector<16x32xf32>
    %23 = vector.shape_cast %22 : vector<16x32xf32> to vector<2x8x32xf32>
    %24 = vector.extract_strided_slice %17 {offsets = [0, 96], sizes = [16, 32], strides = [1, 1]} : vector<16x128xf32> to vector<16x32xf32>
    %25 = vector.shape_cast %24 : vector<16x32xf32> to vector<2x8x32xf32>
    %26 = tpu.concatenate %19, %21, %23, %25 in 0 : vector<2x8x32xf32>, vector<2x8x32xf32>, vector<2x8x32xf32>, vector<2x8x32xf32> -> vector<8x8x32xf32>
    %27 = arith.truncf %26 : vector<8x8x32xf32> to vector<8x8x32xbf16>
    %28 = vector.extract_strided_slice %5 {offsets = [0, 256], sizes = [16, 128], strides = [1, 1]} : vector<16x384xf32> to vector<16x128xf32>
    %29 = vector.extract_strided_slice %28 {offsets = [0, 0], sizes = [16, 32], strides = [1, 1]} : vector<16x128xf32> to vector<16x32xf32>
    %30 = vector.shape_cast %29 : vector<16x32xf32> to vector<2x8x32xf32>
    %31 = vector.extract_strided_slice %28 {offsets = [0, 32], sizes = [16, 32], strides = [1, 1]} : vector<16x128xf32> to vector<16x32xf32>
    %32 = vector.shape_cast %31 : vector<16x32xf32> to vector<2x8x32xf32>
    %33 = vector.extract_strided_slice %28 {offsets = [0, 64], sizes = [16, 32], strides = [1, 1]} : vector<16x128xf32> to vector<16x32xf32>
    %34 = vector.shape_cast %33 : vector<16x32xf32> to vector<2x8x32xf32>
    %35 = vector.extract_strided_slice %28 {offsets = [0, 96], sizes = [16, 32], strides = [1, 1]} : vector<16x128xf32> to vector<16x32xf32>
    %36 = vector.shape_cast %35 : vector<16x32xf32> to vector<2x8x32xf32>
    %37 = tpu.concatenate %30, %32, %34, %36 in 0 : vector<2x8x32xf32>, vector<2x8x32xf32>, vector<2x8x32xf32>, vector<2x8x32xf32> -> vector<8x8x32xf32>
    %38 = arith.truncf %37 : vector<8x8x32xf32> to vector<8x8x32xbf16>
    "tpu.trace_start"() <{level = 10 : i32, message = "gqd,gkd->gqk"}> : () -> ()
    %cst_5 = arith.constant dense<0.000000e+00> : vector<8x8x8xf32>
    %39 = tpu.matmul %16, %27, %cst_5 {dimension_numbers = #tpu.dot_dimension_numbers<[2], [2], [1], [1], [0, 0, 0, 1, 1, 1], [0], [0]>} : vector<8x8x32xbf16>, vector<8x8x32xbf16>, vector<8x8x8xf32> -> vector<8x8x8xf32>
    "tpu.trace_stop"() : () -> ()
    %cst_6 = arith.constant dense<0xFF800000> : vector<8x8xf32>
    %40 = vector.multi_reduction <maximumf>, %39, %cst_6 [2] : vector<8x8x8xf32> to vector<8x8xf32>
    %41 = vector.shape_cast %40 : vector<8x8xf32> to vector<8x8x1xf32>
    %42 = vector.broadcast %41 : vector<8x8x1xf32> to vector<8x8x8xf32>
    %43 = arith.subf %39, %42 : vector<8x8x8xf32>
    %44 = math.exp %43 : vector<8x8x8xf32>
    %cst_7 = arith.constant dense<0.000000e+00> : vector<8x8xf32>
    %45 = vector.multi_reduction <add>, %44, %cst_7 [2] : vector<8x8x8xf32> to vector<8x8xf32>
    %46 = vector.shape_cast %45 : vector<8x8xf32> to vector<8x8x1xf32>
    %47 = tpu.reciprocal %46 {approx = true} : vector<8x8x1xf32> -> vector<8x8x1xf32>
    %48 = vector.broadcast %47 : vector<8x8x1xf32> to vector<8x8x8xf32>
    %49 = arith.mulf %44, %48 : vector<8x8x8xf32>
    %50 = arith.truncf %49 : vector<8x8x8xf32> to vector<8x8x8xbf16>
    "tpu.trace_start"() <{level = 10 : i32, message = "gqk,gkd->gqd"}> : () -> ()
    %cst_8 = arith.constant dense<0.000000e+00> : vector<8x8x32xf32>
    %51 = tpu.matmul %50, %38, %cst_8 {dimension_numbers = #tpu.dot_dimension_numbers<[2], [1], [1], [2], [0, 0, 0, 1, 1, 2], [0], [0]>} : vector<8x8x8xbf16>, vector<8x8x32xbf16>, vector<8x8x32xf32> -> vector<8x8x32xf32>
    "tpu.trace_stop"() : () -> ()
    %52 = vector.shape_cast %51 : vector<8x8x32xf32> to vector<4x16x32xf32>
    %53 = arith.truncf %52 : vector<4x16x32xf32> to vector<4x16x32xbf16>
    %c0_9 = arith.constant 0 : index
    %c0_10 = arith.constant 0 : index
    %c0_11 = arith.constant 0 : index
    %54 = vector.load %arg4[%c0_9, %c0_10, %c0_11] : memref<4x32x32xbf16, #tpu.memory_space<vmem>>, vector<4x32x32xbf16>
    "tpu.trace_start"() <{level = 10 : i32, message = "hrd,hde->hre"}> : () -> ()
    %cst_12 = arith.constant dense<0.000000e+00> : vector<4x16x32xf32>
    %55 = tpu.matmul %53, %54, %cst_12 {dimension_numbers = #tpu.dot_dimension_numbers<[2], [1], [1], [2], [0, 0, 0, 1, 1, 2], [0], [0]>} : vector<4x16x32xbf16>, vector<4x32x32xbf16>, vector<4x16x32xf32> -> vector<4x16x32xf32>
    "tpu.trace_stop"() : () -> ()
    %cst_13 = arith.constant dense<0.000000e+00> : vector<16x32xf32>
    %56 = vector.multi_reduction <add>, %55, %cst_13 [0] : vector<4x16x32xf32> to vector<16x32xf32>
    %c0_14 = arith.constant 0 : index
    %c0_15 = arith.constant 0 : index
    %57 = vector.load %arg5[%c0_14, %c0_15] : memref<1x32xf32, #tpu.memory_space<vmem>>, vector<1x32xf32>
    %58 = vector.broadcast %57 : vector<1x32xf32> to vector<16x32xf32>
    %59 = arith.addf %56, %58 : vector<16x32xf32>
    %c0_16 = arith.constant 0 : index
    %c0_17 = arith.constant 0 : index
    %60 = vector.load %arg6[%c0_16, %c0_17] : memref<16x32xf32, #tpu.memory_space<vmem>>, vector<16x32xf32>
    tpu.vector_store %arg6[%c0_16, %c0_17], %59 {strides = array<i32>} : memref<16x32xf32, #tpu.memory_space<vmem>>, vector<16x32xf32>,
    return
  }
  func.func @transform_0(%arg0: i32) -> (i32, i32) {
    %c0_i32 = arith.constant 0 : i32
    %c0_i32_0 = arith.constant 0 : i32
    return %arg0, %c0_i32 : i32, i32
  }
  func.func @transform_1(%arg0: i32) -> (i32, i32) {
    %c0_i32 = arith.constant 0 : i32
    %c0_i32_0 = arith.constant 0 : i32
    %c0_i32_1 = arith.constant 0 : i32
    return %c0_i32, %c0_i32_0 : i32, i32
  }
  func.func @transform_2(%arg0: i32) -> (i32, i32) {
    %c0_i32 = arith.constant 0 : i32
    %c0_i32_0 = arith.constant 0 : i32
    %c0_i32_1 = arith.constant 0 : i32
    return %c0_i32, %c0_i32_0 : i32, i32
  }
  func.func @transform_3(%arg0: i32) -> (i32, i32, i32) {
    %c0_i32 = arith.constant 0 : i32
    %c0_i32_0 = arith.constant 0 : i32
    %c0_i32_1 = arith.constant 0 : i32
    %c0_i32_2 = arith.constant 0 : i32
    return %c0_i32, %c0_i32_0, %c0_i32_1 : i32, i32, i32
  }
  func.func @transform_4(%arg0: i32) -> (i32, i32) {
    %c0_i32 = arith.constant 0 : i32
    %c0_i32_0 = arith.constant 0 : i32
    %c0_i32_1 = arith.constant 0 : i32
    return %c0_i32, %c0_i32_0 : i32, i32
  }
  func.func @transform_5(%arg0: i32) -> (i32, i32) {
    %c0_i32 = arith.constant 0 : i32
    %c0_i32_0 = arith.constant 0 : i32
    return %arg0, %c0_i32 : i32, i32
  }
}

</mosaic_0001>

<llo_original>
// kernel: tpu_custom_call.1
$region0: #{tpu_custom_call.1}
  #allocation0 [shape = 'u32[]', space=smem, size = 0x4, offset = 0x4, fixed_abs, tag = 'smem constant byte address 0x4 - core index']
  #allocation1 [shape = 'u32[144,128]{1,0:T(1,128)}', space=vmem, size = 0x12000, scoped, tag = 'internal scratch']
  %s0 = inlined_call_operand.hbm [shape: bf16[16,32], index: 0, kind: input, shape index: {}]
  %s1 = inlined_call_operand.hbm [shape: bf16[32,384], index: 1, kind: input, shape index: {}]
  %s2 = inlined_call_operand.vmem [shape: f32[1,384], index: 2, kind: input, shape index: {}]
  %s3 = inlined_call_operand.hbm [shape: bf16[4,32,32], index: 3, kind: input, shape index: {}]
  %s4 = inlined_call_operand.vmem [shape: f32[1,32], index: 4, kind: input, shape index: {}]
  %s5 = inlined_call_operand.hbm [shape: f32[16,32], index: 5, kind: output, shape index: {}]
  %s6 = sld [smem:[#allocation0]]
  $region42: #{tpu_custom_call.1} parent=0
    _
  %s8 = ssub.s32 1, %s6
  %s9 = scalar_select 0, %s8, %s6
  $region1: #{tpu_custom_call.1} parent=0
    #allocation2 [shape = 'u8[4096]{0}', space=vmem, size = 0x1000, scoped, tag = 'input window, operand 0, single buffered']
    #allocation3 [shape = 's32[1]{0}', space=sflag, size = 0x4, scoped, tag = 'scoped memory for tpu_custom_call.1']
    #allocation4 [shape = 's32[1]{0}', space=sflag, size = 0x4, scoped, tag = 'scoped memory for tpu_custom_call.1']
    #allocation5 [shape = 'u8[24576]{0}', space=vmem, size = 0x6000, scoped, tag = 'input window, operand 1, single buffered']
    #allocation6 [shape = 's32[1]{0}', space=sflag, size = 0x4, scoped, tag = 'scoped memory for tpu_custom_call.1']
    #allocation7 [shape = 'u8[32768]{0}', space=vmem, size = 0x8000, scoped, tag = 'input window, operand 3, single buffered']
    #allocation8 [shape = 'u8[8192]{0}', space=vmem, size = 0x2000, scoped, tag = 'output window, operand 0, single buffered']
    %10 = vsyncpa [#allocation3], 0
    %11 = vsyncpa [#allocation6], 0
    %12 = vsyncpa [#allocation4], 0
    // Predicated region
    $region2: #{tpu_custom_call.1} parent=1 // pred_check
      _
    $region3: #{tpu_custom_call.1} parent=1 // pred_check_branch
      %14 = sbr.rel (0) target = $region5
    $region4: #{tpu_custom_call.1} parent=1 // pred_region
      %s16 = ssub.s32 128, 128
      %17 = vsyncadd [#allocation3], %s16
      %s18 = sshll.u32 [#allocation2], 4
      %s19 = int_to_ptr.vmem [resolvable:$true] %s18
      %24 = dma.hbm_to_vmem [thread:$0]  %s0, 128, %s19, [#allocation3], 64, 64, 4
    $region5: #{tpu_custom_call.1} parent=1 // pred_fallthru
      _
    // Predicated region
    $region6: #{tpu_custom_call.1} parent=1 // pred_check
      _
    $region7: #{tpu_custom_call.1} parent=1 // pred_check_branch
      %26 = sbr.rel (0) target = $region9
    $region8: #{tpu_custom_call.1} parent=1 // pred_region
      %s28 = ssub.s32 768, 768
      %29 = vsyncadd [#allocation6], %s28
      %s30 = sshll.u32 [#allocation5], 4
      %s31 = int_to_ptr.vmem [resolvable:$true] %s30
      %36 = dma.hbm_to_vmem [thread:$0]  %s1, 768, %s31, [#allocation6], 192, 192, 12
    $region9: #{tpu_custom_call.1} parent=1 // pred_fallthru
      _
    // Predicated region
    $region10: #{tpu_custom_call.1} parent=1 // pred_check
      _
    $region11: #{tpu_custom_call.1} parent=1 // pred_check_branch
      %38 = sbr.rel (0) target = $region13
    $region12: #{tpu_custom_call.1} parent=1 // pred_region
      _
    $region13: #{tpu_custom_call.1} parent=1 // pred_fallthru
      _
    // Predicated region
    $region14: #{tpu_custom_call.1} parent=1 // pred_check
      _
    $region15: #{tpu_custom_call.1} parent=1 // pred_check_branch
      %40 = sbr.rel (0) target = $region17
    $region16: #{tpu_custom_call.1} parent=1 // pred_region
      %s42 = ssub.s32 1024, 1024
      %43 = vsyncadd [#allocation6], %s42
      %s44 = sshll.u32 [#allocation7], 4
      %s45 = int_to_ptr.vmem [resolvable:$true] %s44
      %50 = dma.hbm_to_vmem [thread:$0]  %s3, 1024, %s45, [#allocation6], 64, 64, 4
    $region17: #{tpu_custom_call.1} parent=1 // pred_fallthru
      _
    // Predicated region
    $region18: #{tpu_custom_call.1} parent=1 // pred_check
      _
    $region19: #{tpu_custom_call.1} parent=1 // pred_check_branch
      %52 = sbr.rel (0) target = $region21
    $region20: #{tpu_custom_call.1} parent=1 // pred_region
      _
    $region21: #{tpu_custom_call.1} parent=1 // pred_fallthru
      _
    // Predicated region
    $region22: #{tpu_custom_call.1} parent=1 // pred_check
      _
    $region23: #{tpu_custom_call.1} parent=1 // pred_check_branch
      %54 = sbr.rel (0) target = $region25
    $region24: #{tpu_custom_call.1} parent=1 // pred_region
      %55 = dma.done [#allocation3], 128
    $region25: #{tpu_custom_call.1} parent=1 // pred_fallthru
      _
    // Predicated region
    $region26: #{tpu_custom_call.1} parent=1 // pred_check
      _
    $region27: #{tpu_custom_call.1} parent=1 // pred_check_branch
      %57 = sbr.rel (0) target = $region29
    $region28: #{tpu_custom_call.1} parent=1 // pred_region
      %58 = dma.done [#allocation6], 768
    $region29: #{tpu_custom_call.1} parent=1 // pred_fallthru
      _
    // Predicated region
    $region30: #{tpu_custom_call.1} parent=1 // pred_check
      _
    $region31: #{tpu_custom_call.1} parent=1 // pred_check_branch
      %60 = sbr.rel (0) target = $region33
    $region32: #{tpu_custom_call.1} parent=1 // pred_region
      %61 = dma.done [#allocation6], 1024
    $region33: #{tpu_custom_call.1} parent=1 // pred_fallthru
      _
    %v63 = vld [vmem:[#allocation2] sm:$0xf]
    %v64 = vld [vmem:[#allocation2 + $0x4] sm:$0xf]
    %v65 = vld [vmem:[#allocation5] sm:$0xff]
    %v66 = vld [vmem:[#allocation5 + $0x8] sm:$0xf]
    %v67 = vld [vmem:[#allocation5 + $0xc] sm:$0xff]
    %v68 = vld [vmem:[#allocation5 + $0x14] sm:$0xf]
    %v69 = vld [vmem:[#allocation5 + $0x18] sm:$0xff]
    %v70 = vld [vmem:[#allocation5 + $0x20] sm:$0xf]
    %v71 = vld [vmem:[#allocation5 + $0x24] sm:$0xff]
    %v72 = vld [vmem:[#allocation5 + $0x2c] sm:$0xf]
    %v73 = vld [vmem:[%s2] sm:$0x7]
    %v75 = vlaneseq
    %v76 = vshrl.u32 %v75, 7
    %v77 = vsub.s32 0, %v76
    %v78 = vrot.slane %v73, %v77
    %v79 = vlaneseq
    %v80 = vshrl.u32 %v79, 7
    %v81 = vsub.s32 1, %v80
    %v82 = vrot.slane %v73, %v81
    %v83 = vlaneseq
    %v84 = vshrl.u32 %v83, 7
    %v85 = vsub.s32 2, %v84
    %v86 = vrot.slane %v73, %v85
    %v92 = vunpack.c.l.b16 %v63
    %v93 = vunpack.c.l.b16 %v64
    %v94 = vpack.c.b16 %v93, %v92
    %v103 = vunpack.c.l.b16 %v65
    %v104 = vunpack.c.h.b16 %v65
    %v105 = vunpack.c.l.b16 %v66
    %v106 = vunpack.c.l.b16 %v67
    %v107 = vunpack.c.h.b16 %v67
    %v108 = vunpack.c.l.b16 %v68
    %v109 = vunpack.c.l.b16 %v69
    %v110 = vunpack.c.h.b16 %v69
    %v111 = vunpack.c.l.b16 %v70
    %v112 = vunpack.c.l.b16 %v71
    %v113 = vunpack.c.h.b16 %v71
    %v114 = vunpack.c.l.b16 %v72
    %v115 = vpack.c.b16 %v106, %v103
    %v116 = vpack.c.b16 %v107, %v104
    %v117 = vpack.c.b16 %v108, %v105
    %v118 = vpack.c.b16 %v112, %v109
    %v119 = vpack.c.b16 %v113, %v110
    %v120 = vpack.c.b16 %v114, %v111
    %vm127 = vcmask 261120
    %v129 = vsel %vm127, %v94, 0
    %131 = vmatprep.subr.bf16.mxu0 %v116
    %132 = vmatpush1.bf16.msra.mxu0 %v115
    %133 = vmatprep.subr.bf16.mxu0 %v119
    %134 = vmatpush1.bf16.msra.mxu0 %v118
    %135 = vmatprep.subr.bf16.mxu0 0
    %136 = vmatpush1.bf16.msra.mxu0 0
    %137 = vmatprep.subr.bf16.mxu0 0
    %138 = vmatpush1.bf16.msra.mxu0 0
    %139 = vmatprep.subr.bf16.mxu0 0
    %140 = vmatpush1.bf16.msra.mxu0 0
    %141 = vmatprep.subr.bf16.mxu0 0
    %142 = vmatpush1.bf16.msra.mxu0 0
    %143 = vmatprep.subr.bf16.mxu0 0
    %144 = vmatpush1.bf16.msra.mxu0 0
    %145 = vmatprep.subr.bf16.mxu0 0
    %146 = vmatpush1.bf16.msra.mxu0 0
    %147 = vmatprep.subr.bf16.mxu0 0
    %148 = vmatpush1.bf16.msra.mxu0 0
    %149 = vmatprep.subr.bf16.mxu0 0
    %150 = vmatpush1.bf16.msra.mxu0 0
    %151 = vmatprep.subr.bf16.mxu0 0
    %152 = vmatpush1.bf16.msra.mxu0 0
    %153 = vmatprep.subr.bf16.mxu0 0
    %154 = vmatpush1.bf16.msra.mxu0 0
    %155 = vmatprep.subr.bf16.mxu0 0
    %156 = vmatpush1.bf16.msra.mxu0 0
    %157 = vmatprep.subr.bf16.mxu0 0
    %158 = vmatpush1.bf16.msra.mxu0 0
    %159 = vmatprep.subr.bf16.mxu0 0
    %160 = vmatpush1.bf16.msra.mxu0 0
    %161 = vmatprep.subr.bf16.mxu0 0
    %162 = vmatpush1.bf16.msra.mxu0 0
    %163 = vmatprep.mubr.bf16.mxu0 0
    %164 = vmatmul.mubr.bf16.gmra.mrb[0].mxu0 %v129
    %v165 = vpop.f32.mrb[0].mxu0
    %v166 = vadd.f32 %v78, %v165
    %v167 = vpop.f32.mrb[0].mxu0
    %v168 = vadd.f32 %v82, %v167
    %v169 = vpop.f32.mrb[0].mxu0
    %v170 = vadd.f32 %v78, %v169
    %v171 = vpop.f32.mrb[0].mxu0
    %v172 = vadd.f32 %v82, %v171
    %173 = vdwg.mxu0
    %174 = vmatprep.subr.bf16.mxu0 0
    %175 = vmatpush1.bf16.msra.mxu0 %v117
    %176 = vmatprep.subr.bf16.mxu0 0
    %177 = vmatpush1.bf16.msra.mxu0 %v120
    %178 = vmatprep.subr.bf16.mxu0 0
    %179 = vmatpush1.bf16.msra.mxu0 0
    %180 = vmatprep.subr.bf16.mxu0 0
    %181 = vmatpush1.bf16.msra.mxu0 0
    %182 = vmatprep.subr.bf16.mxu0 0
    %183 = vmatpush1.bf16.msra.mxu0 0
    %184 = vmatprep.subr.bf16.mxu0 0
    %185 = vmatpush1.bf16.msra.mxu0 0
    %186 = vmatprep.subr.bf16.mxu0 0
    %187 = vmatpush1.bf16.msra.mxu0 0
    %188 = vmatprep.subr.bf16.mxu0 0
    %189 = vmatpush1.bf16.msra.mxu0 0
    %190 = vmatprep.subr.bf16.mxu0 0
    %191 = vmatpush1.bf16.msra.mxu0 0
    %192 = vmatprep.subr.bf16.mxu0 0
    %193 = vmatpush1.bf16.msra.mxu0 0
    %194 = vmatprep.subr.bf16.mxu0 0
    %195 = vmatpush1.bf16.msra.mxu0 0
    %196 = vmatprep.subr.bf16.mxu0 0
    %197 = vmatpush1.bf16.msra.mxu0 0
    %198 = vmatprep.subr.bf16.mxu0 0
    %199 = vmatpush1.bf16.msra.mxu0 0
    %200 = vmatprep.subr.bf16.mxu0 0
    %201 = vmatpush1.bf16.msra.mxu0 0
    %202 = vmatprep.subr.bf16.mxu0 0
    %203 = vmatpush1.bf16.msra.mxu0 0
    %204 = vmatprep.subr.bf16.mxu0 0
    %205 = vmatpush1.bf16.msra.mxu0 0
    %206 = vmatprep.mubr.bf16.mxu0 0
    %207 = vmatmul.mubr.bf16.gmra.mrb[0].mxu0 %v129
    %v208 = vpop.f32.mrb[0].mxu0
    %v209 = vadd.f32 %v86, %v208
    %v210 = vpop.f32.mrb[0].mxu0
    %v211 = vpop.f32.mrb[0].mxu0
    %v212 = vadd.f32 %v86, %v211
    %v213 = vpop.f32.mrb[0].mxu0
    %214 = vdwg.mxu0
    %217 = vrot.lane.b32.xlu0 %v166, 96
    %v218 = vpop.permute.xlu0 %217
    %219 = vrot.lane.b32.xlu0 %v170, 96
    %v220 = vpop.permute.xlu0 %219
    %223 = vrot.lane.b32.xlu0 %v166, 64
    %v224 = vpop.permute.xlu0 %223
    %225 = vrot.lane.b32.xlu0 %v170, 64
    %v226 = vpop.permute.xlu0 %225
    %229 = vrot.lane.b32.xlu0 %v166, 32
    %v230 = vpop.permute.xlu0 %229
    %231 = vrot.lane.b32.xlu0 %v170, 32
    %v232 = vpop.permute.xlu0 %231
    %v235 = vpack.c.bf16 %v166, %v166
    %v236 = vpack.c.bf16 %v170, %v170
    %v237 = vpack.c.bf16 %v218, %v218
    %v238 = vpack.c.bf16 %v220, %v220
    %v239 = vpack.c.bf16 %v224, %v224
    %v240 = vpack.c.bf16 %v226, %v226
    %v241 = vpack.c.bf16 %v230, %v230
    %v242 = vpack.c.bf16 %v232, %v232
    %245 = vrot.lane.b32.xlu0 %v168, 96
    %v246 = vpop.permute.xlu0 %245
    %247 = vrot.lane.b32.xlu0 %v172, 96
    %v248 = vpop.permute.xlu0 %247
    %251 = vrot.lane.b32.xlu0 %v168, 64
    %v252 = vpop.permute.xlu0 %251
    %253 = vrot.lane.b32.xlu0 %v172, 64
    %v254 = vpop.permute.xlu0 %253
    %257 = vrot.lane.b32.xlu0 %v168, 32
    %v258 = vpop.permute.xlu0 %257
    %259 = vrot.lane.b32.xlu0 %v172, 32
    %v260 = vpop.permute.xlu0 %259
    %v263 = vpack.c.bf16 %v168, %v168
    %v264 = vpack.c.bf16 %v172, %v172
    %v265 = vpack.c.bf16 %v246, %v246
    %v266 = vpack.c.bf16 %v248, %v248
    %v267 = vpack.c.bf16 %v252, %v252
    %v268 = vpack.c.bf16 %v254, %v254
    %v269 = vpack.c.bf16 %v258, %v258
    %v270 = vpack.c.bf16 %v260, %v260
    %273 = vrot.lane.b32.xlu0 %v209, 96
    %v274 = vpop.permute.xlu0 %273
    %275 = vrot.lane.b32.xlu0 %v212, 96
    %v276 = vpop.permute.xlu0 %275
    %279 = vrot.lane.b32.xlu0 %v209, 64
    %v280 = vpop.permute.xlu0 %279
    %281 = vrot.lane.b32.xlu0 %v212, 64
    %v282 = vpop.permute.xlu0 %281
    %285 = vrot.lane.b32.xlu0 %v209, 32
    %v286 = vpop.permute.xlu0 %285
    %287 = vrot.lane.b32.xlu0 %v212, 32
    %v288 = vpop.permute.xlu0 %287
    %v291 = vpack.c.bf16 %v209, %v209
    %v292 = vpack.c.bf16 %v212, %v212
    %v293 = vpack.c.bf16 %v274, %v274
    %v294 = vpack.c.bf16 %v276, %v276
    %v295 = vpack.c.bf16 %v280, %v280
    %v296 = vpack.c.bf16 %v282, %v282
    %v297 = vpack.c.bf16 %v286, %v286
    %v298 = vpack.c.bf16 %v288, %v288
    %v300 = vsel %vm127, %v235, 0
    %v303 = vsel %vm127, %v263, 0
    %305 = vmatprep.subr.bf16.mxu0 0
    %306 = vmatpush1.bf16.xpose.msra.mxu0 %v303
    %307 = vmatprep.subr.bf16.mxu0 0
    %308 = vmatpush1.bf16.xpose.msra.mxu0 0
    %309 = vmatprep.subr.bf16.mxu0 0
    %310 = vmatpush1.bf16.xpose.msra.mxu0 0
    %311 = vmatprep.subr.bf16.mxu0 0
    %312 = vmatpush1.bf16.xpose.msra.mxu0 0
    %313 = vmatprep.subr.bf16.mxu0 0
    %314 = vmatpush1.bf16.xpose.msra.mxu0 0
    %315 = vmatprep.subr.bf16.mxu0 0
    %316 = vmatpush1.bf16.xpose.msra.mxu0 0
    %317 = vmatprep.subr.bf16.mxu0 0
    %318 = vmatpush1.bf16.xpose.msra.mxu0 0
    %319 = vmatprep.subr.bf16.mxu0 0
    %320 = vmatpush1.bf16.xpose.msra.mxu0 0
    %321 = vmatprep.subr.bf16.mxu0 0
    %322 = vmatpush1.bf16.xpose.msra.mxu0 0
    %323 = vmatprep.subr.bf16.mxu0 0
    %324 = vmatpush1.bf16.xpose.msra.mxu0 0
    %325 = vmatprep.subr.bf16.mxu0 0
    %326 = vmatpush1.bf16.xpose.msra.mxu0 0
    %327 = vmatprep.subr.bf16.mxu0 0
    %328 = vmatpush1.bf16.xpose.msra.mxu0 0
    %329 = vmatprep.subr.bf16.mxu0 0
    %330 = vmatpush1.bf16.xpose.msra.mxu0 0
    %331 = vmatprep.subr.bf16.mxu0 0
    %332 = vmatpush1.bf16.xpose.msra.mxu0 0
    %333 = vmatprep.subr.bf16.mxu0 0
    %334 = vmatpush1.bf16.xpose.msra.mxu0 0
    %335 = vmatprep.subr.bf16.mxu0 0
    %336 = vmatpush1.bf16.xpose.msra.mxu0 0
    %337 = vmatprep.mubr.bf16.mxu0 0
    %338 = vmatmul.mubr.bf16.gmra.mrb[0].mxu0 %v300
    %v339 = vpop.f32.mrb[0].mxu0
    %v340 = vadd.f32 0.0, %v339
    %v341 = vpop.f32.mrb[0].mxu0
    %v342 = vpop.f32.mrb[0].mxu0
    %v343 = vpop.f32.mrb[0].mxu0
    %344 = vdwg.mxu0
    %v346 = vsel %vm127, %v236, 0
    %v349 = vsel %vm127, %v264, 0
    %351 = vmatprep.subr.bf16.mxu0 0
    %352 = vmatpush1.bf16.xpose.msra.mxu0 %v349
    %353 = vmatprep.subr.bf16.mxu0 0
    %354 = vmatpush1.bf16.xpose.msra.mxu0 0
    %355 = vmatprep.subr.bf16.mxu0 0
    %356 = vmatpush1.bf16.xpose.msra.mxu0 0
    %357 = vmatprep.subr.bf16.mxu0 0
    %358 = vmatpush1.bf16.xpose.msra.mxu0 0
    %359 = vmatprep.subr.bf16.mxu0 0
    %360 = vmatpush1.bf16.xpose.msra.mxu0 0
    %361 = vmatprep.subr.bf16.mxu0 0
    %362 = vmatpush1.bf16.xpose.msra.mxu0 0
    %363 = vmatprep.subr.bf16.mxu0 0
    %364 = vmatpush1.bf16.xpose.msra.mxu0 0
    %365 = vmatprep.subr.bf16.mxu0 0
    %366 = vmatpush1.bf16.xpose.msra.mxu0 0
    %367 = vmatprep.subr.bf16.mxu0 0
    %368 = vmatpush1.bf16.xpose.msra.mxu0 0
    %369 = vmatprep.subr.bf16.mxu0 0
    %370 = vmatpush1.bf16.xpose.msra.mxu0 0
    %371 = vmatprep.subr.bf16.mxu0 0
    %372 = vmatpush1.bf16.xpose.msra.mxu0 0
    %373 = vmatprep.subr.bf16.mxu0 0
    %374 = vmatpush1.bf16.xpose.msra.mxu0 0
    %375 = vmatprep.subr.bf16.mxu0 0
    %376 = vmatpush1.bf16.xpose.msra.mxu0 0
    %377 = vmatprep.subr.bf16.mxu0 0
    %378 = vmatpush1.bf16.xpose.msra.mxu0 0
    %379 = vmatprep.subr.bf16.mxu0 0
    %380 = vmatpush1.bf16.xpose.msra.mxu0 0
    %381 = vmatprep.subr.bf16.mxu0 0
    %382 = vmatpush1.bf16.xpose.msra.mxu0 0
    %383 = vmatprep.mubr.bf16.mxu0 0
    %384 = vmatmul.mubr.bf16.gmra.mrb[0].mxu0 %v346
    %v385 = vpop.f32.mrb[0].mxu0
    %v386 = vadd.f32 0.0, %v385
    %v387 = vpop.f32.mrb[0].mxu0
    %v388 = vpop.f32.mrb[0].mxu0
    %v389 = vpop.f32.mrb[0].mxu0
    %390 = vdwg.mxu0
    %v392 = vsel %vm127, %v237, 0
    %v395 = vsel %vm127, %v265, 0
    %397 = vmatprep.subr.bf16.mxu0 0
    %398 = vmatpush1.bf16.xpose.msra.mxu0 %v395
    %399 = vmatprep.subr.bf16.mxu0 0
    %400 = vmatpush1.bf16.xpose.msra.mxu0 0
    %401 = vmatprep.subr.bf16.mxu0 0
    %402 = vmatpush1.bf16.xpose.msra.mxu0 0
    %403 = vmatprep.subr.bf16.mxu0 0
    %404 = vmatpush1.bf16.xpose.msra.mxu0 0
    %405 = vmatprep.subr.bf16.mxu0 0
    %406 = vmatpush1.bf16.xpose.msra.mxu0 0
    %407 = vmatprep.subr.bf16.mxu0 0
    %408 = vmatpush1.bf16.xpose.msra.mxu0 0
    %409 = vmatprep.subr.bf16.mxu0 0
    %410 = vmatpush1.bf16.xpose.msra.mxu0 0
    %411 = vmatprep.subr.bf16.mxu0 0
    %412 = vmatpush1.bf16.xpose.msra.mxu0 0
    %413 = vmatprep.subr.bf16.mxu0 0
    %414 = vmatpush1.bf16.xpose.msra.mxu0 0
    %415 = vmatprep.subr.bf16.mxu0 0
    %416 = vmatpush1.bf16.xpose.msra.mxu0 0
    %417 = vmatprep.subr.bf16.mxu0 0
    %418 = vmatpush1.bf16.xpose.msra.mxu0 0
    %419 = vmatprep.subr.bf16.mxu0 0
    %420 = vmatpush1.bf16.xpose.msra.mxu0 0
    %421 = vmatprep.subr.bf16.mxu0 0
    %422 = vmatpush1.bf16.xpose.msra.mxu0 0
    %423 = vmatprep.subr.bf16.mxu0 0
    %424 = vmatpush1.bf16.xpose.msra.mxu0 0
    %425 = vmatprep.subr.bf16.mxu0 0
    %426 = vmatpush1.bf16.xpose.msra.mxu0 0
    %427 = vmatprep.subr.bf16.mxu0 0
    %428 = vmatpush1.bf16.xpose.msra.mxu0 0
    %429 = vmatprep.mubr.bf16.mxu0 0
    %430 = vmatmul.mubr.bf16.gmra.mrb[0].mxu0 %v392
    %v431 = vpop.f32.mrb[0].mxu0
    %v432 = vadd.f32 0.0, %v431
    %v433 = vpop.f32.mrb[0].mxu0
    %v434 = vpop.f32.mrb[0].mxu0
    %v435 = vpop.f32.mrb[0].mxu0
    %436 = vdwg.mxu0
    %v438 = vsel %vm127, %v238, 0
    %v441 = vsel %vm127, %v266, 0
    %443 = vmatprep.subr.bf16.mxu0 0
    %444 = vmatpush1.bf16.xpose.msra.mxu0 %v441
    %445 = vmatprep.subr.bf16.mxu0 0
    %446 = vmatpush1.bf16.xpose.msra.mxu0 0
    %447 = vmatprep.subr.bf16.mxu0 0
    %448 = vmatpush1.bf16.xpose.msra.mxu0 0
    %449 = vmatprep.subr.bf16.mxu0 0
    %450 = vmatpush1.bf16.xpose.msra.mxu0 0
    %451 = vmatprep.subr.bf16.mxu0 0
    %452 = vmatpush1.bf16.xpose.msra.mxu0 0
    %453 = vmatprep.subr.bf16.mxu0 0
    %454 = vmatpush1.bf16.xpose.msra.mxu0 0
    %455 = vmatprep.subr.bf16.mxu0 0
    %456 = vmatpush1.bf16.xpose.msra.mxu0 0
    %457 = vmatprep.subr.bf16.mxu0 0
    %458 = vmatpush1.bf16.xpose.msra.mxu0 0
    %459 = vmatprep.subr.bf16.mxu0 0
    %460 = vmatpush1.bf16.xpose.msra.mxu0 0
    %461 = vmatprep.subr.bf16.mxu0 0
    %462 = vmatpush1.bf16.xpose.msra.mxu0 0
    %463 = vmatprep.subr.bf16.mxu0 0
    %464 = vmatpush1.bf16.xpose.msra.mxu0 0
    %465 = vmatprep.subr.bf16.mxu0 0
    %466 = vmatpush1.bf16.xpose.msra.mxu0 0
    %467 = vmatprep.subr.bf16.mxu0 0
    %468 = vmatpush1.bf16.xpose.msra.mxu0 0
    %469 = vmatprep.subr.bf16.mxu0 0
    %470 = vmatpush1.bf16.xpose.msra.mxu0 0
    %471 = vmatprep.subr.bf16.mxu0 0
    %472 = vmatpush1.bf16.xpose.msra.mxu0 0
    %473 = vmatprep.subr.bf16.mxu0 0
    %474 = vmatpush1.bf16.xpose.msra.mxu0 0
    %475 = vmatprep.mubr.bf16.mxu0 0
    %476 = vmatmul.mubr.bf16.gmra.mrb[0].mxu0 %v438
    %v477 = vpop.f32.mrb[0].mxu0
    %v478 = vadd.f32 0.0, %v477
    %v479 = vpop.f32.mrb[0].mxu0
    %v480 = vpop.f32.mrb[0].mxu0
    %v481 = vpop.f32.mrb[0].mxu0
    %482 = vdwg.mxu0
    %v484 = vsel %vm127, %v239, 0
    %v487 = vsel %vm127, %v267, 0
    %489 = vmatprep.subr.bf16.mxu0 0
    %490 = vmatpush1.bf16.xpose.msra.mxu0 %v487
    %491 = vmatprep.subr.bf16.mxu0 0
    %492 = vmatpush1.bf16.xpose.msra.mxu0 0
    %493 = vmatprep.subr.bf16.mxu0 0
    %494 = vmatpush1.bf16.xpose.msra.mxu0 0
    %495 = vmatprep.subr.bf16.mxu0 0
    %496 = vmatpush1.bf16.xpose.msra.mxu0 0
    %497 = vmatprep.subr.bf16.mxu0 0
    %498 = vmatpush1.bf16.xpose.msra.mxu0 0
    %499 = vmatprep.subr.bf16.mxu0 0
    %500 = vmatpush1.bf16.xpose.msra.mxu0 0
    %501 = vmatprep.subr.bf16.mxu0 0
    %502 = vmatpush1.bf16.xpose.msra.mxu0 0
    %503 = vmatprep.subr.bf16.mxu0 0
    %504 = vmatpush1.bf16.xpose.msra.mxu0 0
    %505 = vmatprep.subr.bf16.mxu0 0
    %506 = vmatpush1.bf16.xpose.msra.mxu0 0
    %507 = vmatprep.subr.bf16.mxu0 0
    %508 = vmatpush1.bf16.xpose.msra.mxu0 0
    %509 = vmatprep.subr.bf16.mxu0 0
    %510 = vmatpush1.bf16.xpose.msra.mxu0 0
    %511 = vmatprep.subr.bf16.mxu0 0
    %512 = vmatpush1.bf16.xpose.msra.mxu0 0
    %513 = vmatprep.subr.bf16.mxu0 0
    %514 = vmatpush1.bf16.xpose.msra.mxu0 0
    %515 = vmatprep.subr.bf16.mxu0 0
    %516 = vmatpush1.bf16.xpose.msra.mxu0 0
    %517 = vmatprep.subr.bf16.mxu0 0
    %518 = vmatpush1.bf16.xpose.msra.mxu0 0
    %519 = vmatprep.subr.bf16.mxu0 0
    %520 = vmatpush1.bf16.xpose.msra.mxu0 0
    %521 = vmatprep.mubr.bf16.mxu0 0
    %522 = vmatmul.mubr.bf16.gmra.mrb[0].mxu0 %v484
    %v523 = vpop.f32.mrb[0].mxu0
    %v524 = vadd.f32 0.0, %v523
    %v525 = vpop.f32.mrb[0].mxu0
    %v526 = vpop.f32.mrb[0].mxu0
    %v527 = vpop.f32.mrb[0].mxu0
    %528 = vdwg.mxu0
    %v530 = vsel %vm127, %v240, 0
    %v533 = vsel %vm127, %v268, 0
    %535 = vmatprep.subr.bf16.mxu0 0
    %536 = vmatpush1.bf16.xpose.msra.mxu0 %v533
    %537 = vmatprep.subr.bf16.mxu0 0
    %538 = vmatpush1.bf16.xpose.msra.mxu0 0
    %539 = vmatprep.subr.bf16.mxu0 0
    %540 = vmatpush1.bf16.xpose.msra.mxu0 0
    %541 = vmatprep.subr.bf16.mxu0 0
    %542 = vmatpush1.bf16.xpose.msra.mxu0 0
    %543 = vmatprep.subr.bf16.mxu0 0
    %544 = vmatpush1.bf16.xpose.msra.mxu0 0
    %545 = vmatprep.subr.bf16.mxu0 0
    %546 = vmatpush1.bf16.xpose.msra.mxu0 0
    %547 = vmatprep.subr.bf16.mxu0 0
    %548 = vmatpush1.bf16.xpose.msra.mxu0 0
    %549 = vmatprep.subr.bf16.mxu0 0
    %550 = vmatpush1.bf16.xpose.msra.mxu0 0
    %551 = vmatprep.subr.bf16.mxu0 0
    %552 = vmatpush1.bf16.xpose.msra.mxu0 0
    %553 = vmatprep.subr.bf16.mxu0 0
    %554 = vmatpush1.bf16.xpose.msra.mxu0 0
    %555 = vmatprep.subr.bf16.mxu0 0
    %556 = vmatpush1.bf16.xpose.msra.mxu0 0
    %557 = vmatprep.subr.bf16.mxu0 0
    %558 = vmatpush1.bf16.xpose.msra.mxu0 0
    %559 = vmatprep.subr.bf16.mxu0 0
    %560 = vmatpush1.bf16.xpose.msra.mxu0 0
    %561 = vmatprep.subr.bf16.mxu0 0
    %562 = vmatpush1.bf16.xpose.msra.mxu0 0
    %563 = vmatprep.subr.bf16.mxu0 0
    %564 = vmatpush1.bf16.xpose.msra.mxu0 0
    %565 = vmatprep.subr.bf16.mxu0 0
    %566 = vmatpush1.bf16.xpose.msra.mxu0 0
    %567 = vmatprep.mubr.bf16.mxu0 0
    %568 = vmatmul.mubr.bf16.gmra.mrb[0].mxu0 %v530
    %v569 = vpop.f32.mrb[0].mxu0
    %v570 = vadd.f32 0.0, %v569
    %v571 = vpop.f32.mrb[0].mxu0
    %v572 = vpop.f32.mrb[0].mxu0
    %v573 = vpop.f32.mrb[0].mxu0
    %574 = vdwg.mxu0
    %v576 = vsel %vm127, %v241, 0
    %v579 = vsel %vm127, %v269, 0
    %581 = vmatprep.subr.bf16.mxu0 0
    %582 = vmatpush1.bf16.xpose.msra.mxu0 %v579
    %583 = vmatprep.subr.bf16.mxu0 0
    %584 = vmatpush1.bf16.xpose.msra.mxu0 0
    %585 = vmatprep.subr.bf16.mxu0 0
    %586 = vmatpush1.bf16.xpose.msra.mxu0 0
    %587 = vmatprep.subr.bf16.mxu0 0
    %588 = vmatpush1.bf16.xpose.msra.mxu0 0
    %589 = vmatprep.subr.bf16.mxu0 0
    %590 = vmatpush1.bf16.xpose.msra.mxu0 0
    %591 = vmatprep.subr.bf16.mxu0 0
    %592 = vmatpush1.bf16.xpose.msra.mxu0 0
    %593 = vmatprep.subr.bf16.mxu0 0
    %594 = vmatpush1.bf16.xpose.msra.mxu0 0
    %595 = vmatprep.subr.bf16.mxu0 0
    %596 = vmatpush1.bf16.xpose.msra.mxu0 0
    %597 = vmatprep.subr.bf16.mxu0 0
    %598 = vmatpush1.bf16.xpose.msra.mxu0 0
    %599 = vmatprep.subr.bf16.mxu0 0
    %600 = vmatpush1.bf16.xpose.msra.mxu0 0
    %601 = vmatprep.subr.bf16.mxu0 0
    %602 = vmatpush1.bf16.xpose.msra.mxu0 0
    %603 = vmatprep.subr.bf16.mxu0 0
    %604 = vmatpush1.bf16.xpose.msra.mxu0 0
    %605 = vmatprep.subr.bf16.mxu0 0
    %606 = vmatpush1.bf16.xpose.msra.mxu0 0
    %607 = vmatprep.subr.bf16.mxu0 0
    %608 = vmatpush1.bf16.xpose.msra.mxu0 0
    %609 = vmatprep.subr.bf16.mxu0 0
    %610 = vmatpush1.bf16.xpose.msra.mxu0 0
    %611 = vmatprep.subr.bf16.mxu0 0
    %612 = vmatpush1.bf16.xpose.msra.mxu0 0
    %613 = vmatprep.mubr.bf16.mxu0 0
    %614 = vmatmul.mubr.bf16.gmra.mrb[0].mxu0 %v576
    %v615 = vpop.f32.mrb[0].mxu0
    %v616 = vadd.f32 0.0, %v615
    %v617 = vpop.f32.mrb[0].mxu0
    %v618 = vpop.f32.mrb[0].mxu0
    %v619 = vpop.f32.mrb[0].mxu0
    %620 = vdwg.mxu0
    %v622 = vsel %vm127, %v242, 0
    %v625 = vsel %vm127, %v270, 0
    %627 = vmatprep.subr.bf16.mxu0 0
    %628 = vmatpush1.bf16.xpose.msra.mxu0 %v625
    %629 = vmatprep.subr.bf16.mxu0 0
    %630 = vmatpush1.bf16.xpose.msra.mxu0 0
    %631 = vmatprep.subr.bf16.mxu0 0
    %632 = vmatpush1.bf16.xpose.msra.mxu0 0
    %633 = vmatprep.subr.bf16.mxu0 0
    %634 = vmatpush1.bf16.xpose.msra.mxu0 0
    %635 = vmatprep.subr.bf16.mxu0 0
    %636 = vmatpush1.bf16.xpose.msra.mxu0 0
    %637 = vmatprep.subr.bf16.mxu0 0
    %638 = vmatpush1.bf16.xpose.msra.mxu0 0
    %639 = vmatprep.subr.bf16.mxu0 0
    %640 = vmatpush1.bf16.xpose.msra.mxu0 0
    %641 = vmatprep.subr.bf16.mxu0 0
    %642 = vmatpush1.bf16.xpose.msra.mxu0 0
    %643 = vmatprep.subr.bf16.mxu0 0
    %644 = vmatpush1.bf16.xpose.msra.mxu0 0
    %645 = vmatprep.subr.bf16.mxu0 0
    %646 = vmatpush1.bf16.xpose.msra.mxu0 0
    %647 = vmatprep.subr.bf16.mxu0 0
    %648 = vmatpush1.bf16.xpose.msra.mxu0 0
    %649 = vmatprep.subr.bf16.mxu0 0
    %650 = vmatpush1.bf16.xpose.msra.mxu0 0
    %651 = vmatprep.subr.bf16.mxu0 0
    %652 = vmatpush1.bf16.xpose.msra.mxu0 0
    %653 = vmatprep.subr.bf16.mxu0 0
    %654 = vmatpush1.bf16.xpose.msra.mxu0 0
    %655 = vmatprep.subr.bf16.mxu0 0
    %656 = vmatpush1.bf16.xpose.msra.mxu0 0
    %657 = vmatprep.subr.bf16.mxu0 0
    %658 = vmatpush1.bf16.xpose.msra.mxu0 0
    %659 = vmatprep.mubr.bf16.mxu0 0
    %660 = vmatmul.mubr.bf16.gmra.mrb[0].mxu0 %v622
    %v661 = vpop.f32.mrb[0].mxu0
    %v662 = vadd.f32 0.0, %v661
    %v663 = vpop.f32.mrb[0].mxu0
    %v664 = vpop.f32.mrb[0].mxu0
    %v665 = vpop.f32.mrb[0].mxu0
    %666 = vdwg.mxu0
    %vm667 = vcmask 64512
    %v668 = vsel %vm667, %v340, -inf
    %669 = vmax.xlane.f32.xlu0 %v668
    %v670 = vpop.xlane.xlu0 %669
    %v671 = vsel %vm667, %v386, -inf
    %672 = vmax.xlane.f32.xlu0 %v671
    %v673 = vpop.xlane.xlu0 %672
    %v674 = vsel %vm667, %v432, -inf
    %675 = vmax.xlane.f32.xlu0 %v674
    %v676 = vpop.xlane.xlu0 %675
    %v677 = vsel %vm667, %v478, -inf
    %678 = vmax.xlane.f32.xlu0 %v677
    %v679 = vpop.xlane.xlu0 %678
    %v680 = vsel %vm667, %v524, -inf
    %681 = vmax.xlane.f32.xlu0 %v680
    %v682 = vpop.xlane.xlu0 %681
    %v683 = vsel %vm667, %v570, -inf
    %684 = vmax.xlane.f32.xlu0 %v683
    %v685 = vpop.xlane.xlu0 %684
    %v686 = vsel %vm667, %v616, -inf
    %687 = vmax.xlane.f32.xlu0 %v686
    %v688 = vpop.xlane.xlu0 %687
    %v689 = vsel %vm667, %v662, -inf
    %690 = vmax.xlane.f32.xlu0 %v689
    %v691 = vpop.xlane.xlu0 %690
    %v692 = vsub.f32 %v340, %v670
    %v693 = vsub.f32 %v386, %v673
    %v694 = vsub.f32 %v432, %v676
    %v695 = vsub.f32 %v478, %v679
    %v696 = vsub.f32 %v524, %v682
    %v697 = vsub.f32 %v570, %v685
    %v698 = vsub.f32 %v616, %v688
    %v699 = vsub.f32 %v662, %v691
    %v700 = vmul.f32 %v692, 1.442695
    %v701 = vpow.pop %v700
    %v702 = vmul.f32 %v693, 1.442695
    %v703 = vpow.pop %v702
    %v704 = vmul.f32 %v694, 1.442695
    %v705 = vpow.pop %v704
    %v706 = vmul.f32 %v695, 1.442695
    %v707 = vpow.pop %v706
    %v708 = vmul.f32 %v696, 1.442695
    %v709 = vpow.pop %v708
    %v710 = vmul.f32 %v697, 1.442695
    %v711 = vpow.pop %v710
    %v712 = vmul.f32 %v698, 1.442695
    %v713 = vpow.pop %v712
    %v714 = vmul.f32 %v699, 1.442695
    %v715 = vpow.pop %v714
    %v716 = vsel %vm667, %v701, 0.0
    %717 = vadd.xlane.f32.xlu0 %v716
    %v718 = vpop.xlane.xlu0 %717
    %v719 = vsel %vm667, %v703, 0.0
    %720 = vadd.xlane.f32.xlu0 %v719
    %v721 = vpop.xlane.xlu0 %720
    %v722 = vsel %vm667, %v705, 0.0
    %723 = vadd.xlane.f32.xlu0 %v722
    %v724 = vpop.xlane.xlu0 %723
    %v725 = vsel %vm667, %v707, 0.0
    %726 = vadd.xlane.f32.xlu0 %v725
    %v727 = vpop.xlane.xlu0 %726
    %v728 = vsel %vm667, %v709, 0.0
    %729 = vadd.xlane.f32.xlu0 %v728
    %v730 = vpop.xlane.xlu0 %729
    %v731 = vsel %vm667, %v711, 0.0
    %732 = vadd.xlane.f32.xlu0 %v731
    %v733 = vpop.xlane.xlu0 %732
    %v734 = vsel %vm667, %v713, 0.0
    %735 = vadd.xlane.f32.xlu0 %v734
    %v736 = vpop.xlane.xlu0 %735
    %v737 = vsel %vm667, %v715, 0.0
    %738 = vadd.xlane.f32.xlu0 %v737
    %v739 = vpop.xlane.xlu0 %738
    %v740 = vrcp.pop %v718
    %v741 = vrcp.pop %v721
    %v742 = vrcp.pop %v724
    %v743 = vrcp.pop %v727
    %v744 = vrcp.pop %v730
    %v745 = vrcp.pop %v733
    %v746 = vrcp.pop %v736
    %v747 = vrcp.pop %v739
    %v748 = vmul.f32 %v701, %v740
    %v749 = vmul.f32 %v703, %v741
    %v750 = vmul.f32 %v705, %v742
    %v751 = vmul.f32 %v707, %v743
    %v752 = vmul.f32 %v709, %v744
    %v753 = vmul.f32 %v711, %v745
    %v754 = vmul.f32 %v713, %v746
    %v755 = vmul.f32 %v715, %v747
    %v756 = vpack.c.bf16 %v748, %v748
    %v757 = vpack.c.bf16 %v749, %v749
    %v758 = vpack.c.bf16 %v750, %v750
    %v759 = vpack.c.bf16 %v751, %v751
    %v760 = vpack.c.bf16 %v752, %v752
    %v761 = vpack.c.bf16 %v753, %v753
    %v762 = vpack.c.bf16 %v754, %v754
    %v763 = vpack.c.bf16 %v755, %v755
    %v765 = vsel %vm667, %v756, 0
    %vm767 = vcmask 1043456
    %v769 = vsel %vm767, %v291, 0
    %771 = vmatprep.subr.bf16.mxu0 0
    %772 = vmatpush1.bf16.msra.mxu0 %v769
    %773 = vmatprep.subr.bf16.mxu0 0
    %774 = vmatpush1.bf16.msra.mxu0 0
    %775 = vmatprep.subr.bf16.mxu0 0
    %776 = vmatpush1.bf16.msra.mxu0 0
    %777 = vmatprep.subr.bf16.mxu0 0
    %778 = vmatpush1.bf16.msra.mxu0 0
    %779 = vmatprep.subr.bf16.mxu0 0
    %780 = vmatpush1.bf16.msra.mxu0 0
    %781 = vmatprep.subr.bf16.mxu0 0
    %782 = vmatpush1.bf16.msra.mxu0 0
    %783 = vmatprep.subr.bf16.mxu0 0
    %784 = vmatpush1.bf16.msra.mxu0 0
    %785 = vmatprep.subr.bf16.mxu0 0
    %786 = vmatpush1.bf16.msra.mxu0 0
    %787 = vmatprep.subr.bf16.mxu0 0
    %788 = vmatpush1.bf16.msra.mxu0 0
    %789 = vmatprep.subr.bf16.mxu0 0
    %790 = vmatpush1.bf16.msra.mxu0 0
    %791 = vmatprep.subr.bf16.mxu0 0
    %792 = vmatpush1.bf16.msra.mxu0 0
    %793 = vmatprep.subr.bf16.mxu0 0
    %794 = vmatpush1.bf16.msra.mxu0 0
    %795 = vmatprep.subr.bf16.mxu0 0
    %796 = vmatpush1.bf16.msra.mxu0 0
    %797 = vmatprep.subr.bf16.mxu0 0
    %798 = vmatpush1.bf16.msra.mxu0 0
    %799 = vmatprep.subr.bf16.mxu0 0
    %800 = vmatpush1.bf16.msra.mxu0 0
    %801 = vmatprep.subr.bf16.mxu0 0
    %802 = vmatpush1.bf16.msra.mxu0 0
    %803 = vmatprep.mubr.bf16.mxu0 0
    %804 = vmatmul.mubr.bf16.gmra.mrb[0].mxu0 %v765
    %v805 = vpop.f32.mrb[0].mxu0
    %v806 = vadd.f32 0.0, %v805
    %v807 = vpop.f32.mrb[0].mxu0
    %v808 = vpop.f32.mrb[0].mxu0
    %v809 = vpop.f32.mrb[0].mxu0
    %810 = vdwg.mxu0
    %v812 = vsel %vm667, %v757, 0
    %v815 = vsel %vm767, %v292, 0
    %817 = vmatprep.subr.bf16.mxu0 0
    %818 = vmatpush1.bf16.msra.mxu0 %v815
    %819 = vmatprep.subr.bf16.mxu0 0
    %820 = vmatpush1.bf16.msra.mxu0 0
    %821 = vmatprep.subr.bf16.mxu0 0
    %822 = vmatpush1.bf16.msra.mxu0 0
    %823 = vmatprep.subr.bf16.mxu0 0
    %824 = vmatpush1.bf16.msra.mxu0 0
    %825 = vmatprep.subr.bf16.mxu0 0
    %826 = vmatpush1.bf16.msra.mxu0 0
    %827 = vmatprep.subr.bf16.mxu0 0
    %828 = vmatpush1.bf16.msra.mxu0 0
    %829 = vmatprep.subr.bf16.mxu0 0
    %830 = vmatpush1.bf16.msra.mxu0 0
    %831 = vmatprep.subr.bf16.mxu0 0
    %832 = vmatpush1.bf16.msra.mxu0 0
    %833 = vmatprep.subr.bf16.mxu0 0
    %834 = vmatpush1.bf16.msra.mxu0 0
    %835 = vmatprep.subr.bf16.mxu0 0
    %836 = vmatpush1.bf16.msra.mxu0 0
    %837 = vmatprep.subr.bf16.mxu0 0
    %838 = vmatpush1.bf16.msra.mxu0 0
    %839 = vmatprep.subr.bf16.mxu0 0
    %840 = vmatpush1.bf16.msra.mxu0 0
    %841 = vmatprep.subr.bf16.mxu0 0
    %842 = vmatpush1.bf16.msra.mxu0 0
    %843 = vmatprep.subr.bf16.mxu0 0
    %844 = vmatpush1.bf16.msra.mxu0 0
    %845 = vmatprep.subr.bf16.mxu0 0
    %846 = vmatpush1.bf16.msra.mxu0 0
    %847 = vmatprep.subr.bf16.mxu0 0
    %848 = vmatpush1.bf16.msra.mxu0 0
    %849 = vmatprep.mubr.bf16.mxu0 0
    %850 = vmatmul.mubr.bf16.gmra.mrb[0].mxu0 %v812
    %v851 = vpop.f32.mrb[0].mxu0
    %v852 = vadd.f32 0.0, %v851
    %v853 = vpop.f32.mrb[0].mxu0
    %v854 = vpop.f32.mrb[0].mxu0
    %v855 = vpop.f32.mrb[0].mxu0
    %856 = vdwg.mxu0
    %v858 = vsel %vm667, %v758, 0
    %v861 = vsel %vm767, %v293, 0
    %863 = vmatprep.subr.bf16.mxu0 0
    %864 = vmatpush1.bf16.msra.mxu0 %v861
    %865 = vmatprep.subr.bf16.mxu0 0
    %866 = vmatpush1.bf16.msra.mxu0 0
    %867 = vmatprep.subr.bf16.mxu0 0
    %868 = vmatpush1.bf16.msra.mxu0 0
    %869 = vmatprep.subr.bf16.mxu0 0
    %870 = vmatpush1.bf16.msra.mxu0 0
    %871 = vmatprep.subr.bf16.mxu0 0
    %872 = vmatpush1.bf16.msra.mxu0 0
    %873 = vmatprep.subr.bf16.mxu0 0
    %874 = vmatpush1.bf16.msra.mxu0 0
    %875 = vmatprep.subr.bf16.mxu0 0
    %876 = vmatpush1.bf16.msra.mxu0 0
    %877 = vmatprep.subr.bf16.mxu0 0
    %878 = vmatpush1.bf16.msra.mxu0 0
    %879 = vmatprep.subr.bf16.mxu0 0
    %880 = vmatpush1.bf16.msra.mxu0 0
    %881 = vmatprep.subr.bf16.mxu0 0
    %882 = vmatpush1.bf16.msra.mxu0 0
    %883 = vmatprep.subr.bf16.mxu0 0
    %884 = vmatpush1.bf16.msra.mxu0 0
    %885 = vmatprep.subr.bf16.mxu0 0
    %886 = vmatpush1.bf16.msra.mxu0 0
    %887 = vmatprep.subr.bf16.mxu0 0
    %888 = vmatpush1.bf16.msra.mxu0 0
    %889 = vmatprep.subr.bf16.mxu0 0
    %890 = vmatpush1.bf16.msra.mxu0 0
    %891 = vmatprep.subr.bf16.mxu0 0
    %892 = vmatpush1.bf16.msra.mxu0 0
    %893 = vmatprep.subr.bf16.mxu0 0
    %894 = vmatpush1.bf16.msra.mxu0 0
    %895 = vmatprep.mubr.bf16.mxu0 0
    %896 = vmatmul.mubr.bf16.gmra.mrb[0].mxu0 %v858
    %v897 = vpop.f32.mrb[0].mxu0
    %v898 = vadd.f32 0.0, %v897
    %v899 = vpop.f32.mrb[0].mxu0
    %v900 = vpop.f32.mrb[0].mxu0
    %v901 = vpop.f32.mrb[0].mxu0
    %902 = vdwg.mxu0
    %v904 = vsel %vm667, %v759, 0
    %v907 = vsel %vm767, %v294, 0
    %909 = vmatprep.subr.bf16.mxu0 0
    %910 = vmatpush1.bf16.msra.mxu0 %v907
    %911 = vmatprep.subr.bf16.mxu0 0
    %912 = vmatpush1.bf16.msra.mxu0 0
    %913 = vmatprep.subr.bf16.mxu0 0
    %914 = vmatpush1.bf16.msra.mxu0 0
    %915 = vmatprep.subr.bf16.mxu0 0
    %916 = vmatpush1.bf16.msra.mxu0 0
    %917 = vmatprep.subr.bf16.mxu0 0
    %918 = vmatpush1.bf16.msra.mxu0 0
    %919 = vmatprep.subr.bf16.mxu0 0
    %920 = vmatpush1.bf16.msra.mxu0 0
    %921 = vmatprep.subr.bf16.mxu0 0
    %922 = vmatpush1.bf16.msra.mxu0 0
    %923 = vmatprep.subr.bf16.mxu0 0
    %924 = vmatpush1.bf16.msra.mxu0 0
    %925 = vmatprep.subr.bf16.mxu0 0
    %926 = vmatpush1.bf16.msra.mxu0 0
    %927 = vmatprep.subr.bf16.mxu0 0
    %928 = vmatpush1.bf16.msra.mxu0 0
    %929 = vmatprep.subr.bf16.mxu0 0
    %930 = vmatpush1.bf16.msra.mxu0 0
    %931 = vmatprep.subr.bf16.mxu0 0
    %932 = vmatpush1.bf16.msra.mxu0 0
    %933 = vmatprep.subr.bf16.mxu0 0
    %934 = vmatpush1.bf16.msra.mxu0 0
    %935 = vmatprep.subr.bf16.mxu0 0
    %936 = vmatpush1.bf16.msra.mxu0 0
    %937 = vmatprep.subr.bf16.mxu0 0
    %938 = vmatpush1.bf16.msra.mxu0 0
    %939 = vmatprep.subr.bf16.mxu0 0
    %940 = vmatpush1.bf16.msra.mxu0 0
    %941 = vmatprep.mubr.bf16.mxu0 0
    %942 = vmatmul.mubr.bf16.gmra.mrb[0].mxu0 %v904
    %v943 = vpop.f32.mrb[0].mxu0
    %v944 = vadd.f32 0.0, %v943
    %v945 = vpop.f32.mrb[0].mxu0
    %v946 = vpop.f32.mrb[0].mxu0
    %v947 = vpop.f32.mrb[0].mxu0
    %948 = vdwg.mxu0
    %v950 = vsel %vm667, %v760, 0
    %v953 = vsel %vm767, %v295, 0
    %955 = vmatprep.subr.bf16.mxu0 0
    %956 = vmatpush1.bf16.msra.mxu0 %v953
    %957 = vmatprep.subr.bf16.mxu0 0
    %958 = vmatpush1.bf16.msra.mxu0 0
    %959 = vmatprep.subr.bf16.mxu0 0
    %960 = vmatpush1.bf16.msra.mxu0 0
    %961 = vmatprep.subr.bf16.mxu0 0
    %962 = vmatpush1.bf16.msra.mxu0 0
    %963 = vmatprep.subr.bf16.mxu0 0
    %964 = vmatpush1.bf16.msra.mxu0 0
    %965 = vmatprep.subr.bf16.mxu0 0
    %966 = vmatpush1.bf16.msra.mxu0 0
    %967 = vmatprep.subr.bf16.mxu0 0
    %968 = vmatpush1.bf16.msra.mxu0 0
    %969 = vmatprep.subr.bf16.mxu0 0
    %970 = vmatpush1.bf16.msra.mxu0 0
    %971 = vmatprep.subr.bf16.mxu0 0
    %972 = vmatpush1.bf16.msra.mxu0 0
    %973 = vmatprep.subr.bf16.mxu0 0
    %974 = vmatpush1.bf16.msra.mxu0 0
    %975 = vmatprep.subr.bf16.mxu0 0
    %976 = vmatpush1.bf16.msra.mxu0 0
    %977 = vmatprep.subr.bf16.mxu0 0
    %978 = vmatpush1.bf16.msra.mxu0 0
    %979 = vmatprep.subr.bf16.mxu0 0
    %980 = vmatpush1.bf16.msra.mxu0 0
    %981 = vmatprep.subr.bf16.mxu0 0
    %982 = vmatpush1.bf16.msra.mxu0 0
    %983 = vmatprep.subr.bf16.mxu0 0
    %984 = vmatpush1.bf16.msra.mxu0 0
    %985 = vmatprep.subr.bf16.mxu0 0
    %986 = vmatpush1.bf16.msra.mxu0 0
    %987 = vmatprep.mubr.bf16.mxu0 0
    %988 = vmatmul.mubr.bf16.gmra.mrb[0].mxu0 %v950
    %v989 = vpop.f32.mrb[0].mxu0
    %v990 = vadd.f32 0.0, %v989
    %v991 = vpop.f32.mrb[0].mxu0
    %v992 = vpop.f32.mrb[0].mxu0
    %v993 = vpop.f32.mrb[0].mxu0
    %994 = vdwg.mxu0
    %v996 = vsel %vm667, %v761, 0
    %v999 = vsel %vm767, %v296, 0
    %1001 = vmatprep.subr.bf16.mxu0 0
    %1002 = vmatpush1.bf16.msra.mxu0 %v999
    %1003 = vmatprep.subr.bf16.mxu0 0
    %1004 = vmatpush1.bf16.msra.mxu0 0
    %1005 = vmatprep.subr.bf16.mxu0 0
    %1006 = vmatpush1.bf16.msra.mxu0 0
    %1007 = vmatprep.subr.bf16.mxu0 0
    %1008 = vmatpush1.bf16.msra.mxu0 0
    %1009 = vmatprep.subr.bf16.mxu0 0
    %1010 = vmatpush1.bf16.msra.mxu0 0
    %1011 = vmatprep.subr.bf16.mxu0 0
    %1012 = vmatpush1.bf16.msra.mxu0 0
    %1013 = vmatprep.subr.bf16.mxu0 0
    %1014 = vmatpush1.bf16.msra.mxu0 0
    %1015 = vmatprep.subr.bf16.mxu0 0
    %1016 = vmatpush1.bf16.msra.mxu0 0
    %1017 = vmatprep.subr.bf16.mxu0 0
    %1018 = vmatpush1.bf16.msra.mxu0 0
    %1019 = vmatprep.subr.bf16.mxu0 0
    %1020 = vmatpush1.bf16.msra.mxu0 0
    %1021 = vmatprep.subr.bf16.mxu0 0
    %1022 = vmatpush1.bf16.msra.mxu0 0
    %1023 = vmatprep.subr.bf16.mxu0 0
    %1024 = vmatpush1.bf16.msra.mxu0 0
    %1025 = vmatprep.subr.bf16.mxu0 0
    %1026 = vmatpush1.bf16.msra.mxu0 0
    %1027 = vmatprep.subr.bf16.mxu0 0
    %1028 = vmatpush1.bf16.msra.mxu0 0
    %1029 = vmatprep.subr.bf16.mxu0 0
    %1030 = vmatpush1.bf16.msra.mxu0 0
    %1031 = vmatprep.subr.bf16.mxu0 0
    %1032 = vmatpush1.bf16.msra.mxu0 0
    %1033 = vmatprep.mubr.bf16.mxu0 0
    %1034 = vmatmul.mubr.bf16.gmra.mrb[0].mxu0 %v996
    %v1035 = vpop.f32.mrb[0].mxu0
    %v1036 = vadd.f32 0.0, %v1035
    %v1037 = vpop.f32.mrb[0].mxu0
    %v1038 = vpop.f32.mrb[0].mxu0
    %v1039 = vpop.f32.mrb[0].mxu0
    %1040 = vdwg.mxu0
    %v1042 = vsel %vm667, %v762, 0
    %v1045 = vsel %vm767, %v297, 0
    %1047 = vmatprep.subr.bf16.mxu0 0
    %1048 = vmatpush1.bf16.msra.mxu0 %v1045
    %1049 = vmatprep.subr.bf16.mxu0 0
    %1050 = vmatpush1.bf16.msra.mxu0 0
    %1051 = vmatprep.subr.bf16.mxu0 0
    %1052 = vmatpush1.bf16.msra.mxu0 0
    %1053 = vmatprep.subr.bf16.mxu0 0
    %1054 = vmatpush1.bf16.msra.mxu0 0
    %1055 = vmatprep.subr.bf16.mxu0 0
    %1056 = vmatpush1.bf16.msra.mxu0 0
    %1057 = vmatprep.subr.bf16.mxu0 0
    %1058 = vmatpush1.bf16.msra.mxu0 0
    %1059 = vmatprep.subr.bf16.mxu0 0
    %1060 = vmatpush1.bf16.msra.mxu0 0
    %1061 = vmatprep.subr.bf16.mxu0 0
    %1062 = vmatpush1.bf16.msra.mxu0 0
    %1063 = vmatprep.subr.bf16.mxu0 0
    %1064 = vmatpush1.bf16.msra.mxu0 0
    %1065 = vmatprep.subr.bf16.mxu0 0
    %1066 = vmatpush1.bf16.msra.mxu0 0
    %1067 = vmatprep.subr.bf16.mxu0 0
    %1068 = vmatpush1.bf16.msra.mxu0 0
    %1069 = vmatprep.subr.bf16.mxu0 0
    %1070 = vmatpush1.bf16.msra.mxu0 0
    %1071 = vmatprep.subr.bf16.mxu0 0
    %1072 = vmatpush1.bf16.msra.mxu0 0
    %1073 = vmatprep.subr.bf16.mxu0 0
    %1074 = vmatpush1.bf16.msra.mxu0 0
    %1075 = vmatprep.subr.bf16.mxu0 0
    %1076 = vmatpush1.bf16.msra.mxu0 0
    %1077 = vmatprep.subr.bf16.mxu0 0
    %1078 = vmatpush1.bf16.msra.mxu0 0
    %1079 = vmatprep.mubr.bf16.mxu0 0
    %1080 = vmatmul.mubr.bf16.gmra.mrb[0].mxu0 %v1042
    %v1081 = vpop.f32.mrb[0].mxu0
    %v1082 = vadd.f32 0.0, %v1081
    %v1083 = vpop.f32.mrb[0].mxu0
    %v1084 = vpop.f32.mrb[0].mxu0
    %v1085 = vpop.f32.mrb[0].mxu0
    %1086 = vdwg.mxu0
    %v1088 = vsel %vm667, %v763, 0
    %v1091 = vsel %vm767, %v298, 0
    %1093 = vmatprep.subr.bf16.mxu0 0
    %1094 = vmatpush1.bf16.msra.mxu0 %v1091
    %1095 = vmatprep.subr.bf16.mxu0 0
    %1096 = vmatpush1.bf16.msra.mxu0 0
    %1097 = vmatprep.subr.bf16.mxu0 0
    %1098 = vmatpush1.bf16.msra.mxu0 0
    %1099 = vmatprep.subr.bf16.mxu0 0
    %1100 = vmatpush1.bf16.msra.mxu0 0
    %1101 = vmatprep.subr.bf16.mxu0 0
    %1102 = vmatpush1.bf16.msra.mxu0 0
    %1103 = vmatprep.subr.bf16.mxu0 0
    %1104 = vmatpush1.bf16.msra.mxu0 0
    %1105 = vmatprep.subr.bf16.mxu0 0
    %1106 = vmatpush1.bf16.msra.mxu0 0
    %1107 = vmatprep.subr.bf16.mxu0 0
    %1108 = vmatpush1.bf16.msra.mxu0 0
    %1109 = vmatprep.subr.bf16.mxu0 0
    %1110 = vmatpush1.bf16.msra.mxu0 0
    %1111 = vmatprep.subr.bf16.mxu0 0
    %1112 = vmatpush1.bf16.msra.mxu0 0
    %1113 = vmatprep.subr.bf16.mxu0 0
    %1114 = vmatpush1.bf16.msra.mxu0 0
    %1115 = vmatprep.subr.bf16.mxu0 0
    %1116 = vmatpush1.bf16.msra.mxu0 0
    %1117 = vmatprep.subr.bf16.mxu0 0
    %1118 = vmatpush1.bf16.msra.mxu0 0
    %1119 = vmatprep.subr.bf16.mxu0 0
    %1120 = vmatpush1.bf16.msra.mxu0 0
    %1121 = vmatprep.subr.bf16.mxu0 0
    %1122 = vmatpush1.bf16.msra.mxu0 0
    %1123 = vmatprep.subr.bf16.mxu0 0
    %1124 = vmatpush1.bf16.msra.mxu0 0
    %1125 = vmatprep.mubr.bf16.mxu0 0
    %1126 = vmatmul.mubr.bf16.gmra.mrb[0].mxu0 %v1088
    %v1127 = vpop.f32.mrb[0].mxu0
    %v1128 = vadd.f32 0.0, %v1127
    %v1129 = vpop.f32.mrb[0].mxu0
    %v1130 = vpop.f32.mrb[0].mxu0
    %v1131 = vpop.f32.mrb[0].mxu0
    %1132 = vdwg.mxu0
    %v1133 = vpack.c.bf16 %v852, %v806
    %v1134 = vpack.c.bf16 %v944, %v898
    %v1135 = vpack.c.bf16 %v1036, %v990
    %v1136 = vpack.c.bf16 %v1128, %v1082
    %v1137 = vld [vmem:[#allocation7] sm:$0xf]
    %v1138 = vld [vmem:[#allocation7 + $0x4] sm:$0xf]
    %v1139 = vld [vmem:[#allocation7 + $0x8] sm:$0xf]
    %v1140 = vld [vmem:[#allocation7 + $0xc] sm:$0xf]
    %v1141 = vld [vmem:[#allocation7 + $0x10] sm:$0xf]
    %v1142 = vld [vmem:[#allocation7 + $0x14] sm:$0xf]
    %v1143 = vld [vmem:[#allocation7 + $0x18] sm:$0xf]
    %v1144 = vld [vmem:[#allocation7 + $0x1c] sm:$0xf]
    %v1145 = vld [vmem:[#allocation7 + $0x20] sm:$0xf]
    %v1146 = vld [vmem:[#allocation7 + $0x24] sm:$0xf]
    %v1147 = vld [vmem:[#allocation7 + $0x28] sm:$0xf]
    %v1148 = vld [vmem:[#allocation7 + $0x2c] sm:$0xf]
    %v1149 = vld [vmem:[#allocation7 + $0x30] sm:$0xf]
    %v1150 = vld [vmem:[#allocation7 + $0x34] sm:$0xf]
    %v1151 = vld [vmem:[#allocation7 + $0x38] sm:$0xf]
    %v1152 = vld [vmem:[#allocation7 + $0x3c] sm:$0xf]
    %v1157 = vunpack.c.l.b16 %v1137
    %v1158 = vunpack.c.l.b16 %v1138
    %v1159 = vunpack.c.l.b16 %v1139
    %v1160 = vunpack.c.l.b16 %v1140
    %v1161 = vpack.c.b16 %v1158, %v1157
    %v1162 = vpack.c.b16 %v1160, %v1159
    %v1166 = vsel %vm127, %v1133, 0
    %1168 = vmatprep.subr.bf16.mxu0 0
    %1169 = vmatpush1.bf16.msra.mxu0 %v1161
    %1170 = vmatprep.subr.bf16.mxu0 0
    %1171 = vmatpush1.bf16.msra.mxu0 %v1162
    %1172 = vmatprep.subr.bf16.mxu0 0
    %1173 = vmatpush1.bf16.msra.mxu0 0
    %1174 = vmatprep.subr.bf16.mxu0 0
    %1175 = vmatpush1.bf16.msra.mxu0 0
    %1176 = vmatprep.subr.bf16.mxu0 0
    %1177 = vmatpush1.bf16.msra.mxu0 0
    %1178 = vmatprep.subr.bf16.mxu0 0
    %1179 = vmatpush1.bf16.msra.mxu0 0
    %1180 = vmatprep.subr.bf16.mxu0 0
    %1181 = vmatpush1.bf16.msra.mxu0 0
    %1182 = vmatprep.subr.bf16.mxu0 0
    %1183 = vmatpush1.bf16.msra.mxu0 0
    %1184 = vmatprep.subr.bf16.mxu0 0
    %1185 = vmatpush1.bf16.msra.mxu0 0
    %1186 = vmatprep.subr.bf16.mxu0 0
    %1187 = vmatpush1.bf16.msra.mxu0 0
    %1188 = vmatprep.subr.bf16.mxu0 0
    %1189 = vmatpush1.bf16.msra.mxu0 0
    %1190 = vmatprep.subr.bf16.mxu0 0
    %1191 = vmatpush1.bf16.msra.mxu0 0
    %1192 = vmatprep.subr.bf16.mxu0 0
    %1193 = vmatpush1.bf16.msra.mxu0 0
    %1194 = vmatprep.subr.bf16.mxu0 0
    %1195 = vmatpush1.bf16.msra.mxu0 0
    %1196 = vmatprep.subr.bf16.mxu0 0
    %1197 = vmatpush1.bf16.msra.mxu0 0
    %1198 = vmatprep.subr.bf16.mxu0 0
    %1199 = vmatpush1.bf16.msra.mxu0 0
    %1200 = vmatprep.mubr.bf16.mxu0 0
    %1201 = vmatmul.mubr.bf16.gmra.mrb[0].mxu0 %v1166
    %v1202 = vpop.f32.mrb[0].mxu0
    %v1203 = vadd.f32 0.0, %v1202
    %v1204 = vpop.f32.mrb[0].mxu0
    %v1205 = vpop.f32.mrb[0].mxu0
    %v1206 = vadd.f32 0.0, %v1205
    %v1207 = vpop.f32.mrb[0].mxu0
    %1208 = vdwg.mxu0
    %v1213 = vunpack.c.l.b16 %v1141
    %v1214 = vunpack.c.l.b16 %v1142
    %v1215 = vunpack.c.l.b16 %v1143
    %v1216 = vunpack.c.l.b16 %v1144
    %v1217 = vpack.c.b16 %v1214, %v1213
    %v1218 = vpack.c.b16 %v1216, %v1215
    %v1222 = vsel %vm127, %v1134, 0
    %1224 = vmatprep.subr.bf16.mxu0 0
    %1225 = vmatpush1.bf16.msra.mxu0 %v1217
    %1226 = vmatprep.subr.bf16.mxu0 0
    %1227 = vmatpush1.bf16.msra.mxu0 %v1218
    %1228 = vmatprep.subr.bf16.mxu0 0
    %1229 = vmatpush1.bf16.msra.mxu0 0
    %1230 = vmatprep.subr.bf16.mxu0 0
    %1231 = vmatpush1.bf16.msra.mxu0 0
    %1232 = vmatprep.subr.bf16.mxu0 0
    %1233 = vmatpush1.bf16.msra.mxu0 0
    %1234 = vmatprep.subr.bf16.mxu0 0
    %1235 = vmatpush1.bf16.msra.mxu0 0
    %1236 = vmatprep.subr.bf16.mxu0 0
    %1237 = vmatpush1.bf16.msra.mxu0 0
    %1238 = vmatprep.subr.bf16.mxu0 0
    %1239 = vmatpush1.bf16.msra.mxu0 0
    %1240 = vmatprep.subr.bf16.mxu0 0
    %1241 = vmatpush1.bf16.msra.mxu0 0
    %1242 = vmatprep.subr.bf16.mxu0 0
    %1243 = vmatpush1.bf16.msra.mxu0 0
    %1244 = vmatprep.subr.bf16.mxu0 0
    %1245 = vmatpush1.bf16.msra.mxu0 0
    %1246 = vmatprep.subr.bf16.mxu0 0
    %1247 = vmatpush1.bf16.msra.mxu0 0
    %1248 = vmatprep.subr.bf16.mxu0 0
    %1249 = vmatpush1.bf16.msra.mxu0 0
    %1250 = vmatprep.subr.bf16.mxu0 0
    %1251 = vmatpush1.bf16.msra.mxu0 0
    %1252 = vmatprep.subr.bf16.mxu0 0
    %1253 = vmatpush1.bf16.msra.mxu0 0
    %1254 = vmatprep.subr.bf16.mxu0 0
    %1255 = vmatpush1.bf16.msra.mxu0 0
    %1256 = vmatprep.mubr.bf16.mxu0 0
    %1257 = vmatmul.mubr.bf16.gmra.mrb[0].mxu0 %v1222
    %v1258 = vpop.f32.mrb[0].mxu0
    %v1259 = vadd.f32 0.0, %v1258
    %v1260 = vpop.f32.mrb[0].mxu0
    %v1261 = vpop.f32.mrb[0].mxu0
    %v1262 = vadd.f32 0.0, %v1261
    %v1263 = vpop.f32.mrb[0].mxu0
    %1264 = vdwg.mxu0
    %v1269 = vunpack.c.l.b16 %v1145
    %v1270 = vunpack.c.l.b16 %v1146
    %v1271 = vunpack.c.l.b16 %v1147
    %v1272 = vunpack.c.l.b16 %v1148
    %v1273 = vpack.c.b16 %v1270, %v1269
    %v1274 = vpack.c.b16 %v1272, %v1271
    %v1278 = vsel %vm127, %v1135, 0
    %1280 = vmatprep.subr.bf16.mxu0 0
    %1281 = vmatpush1.bf16.msra.mxu0 %v1273
    %1282 = vmatprep.subr.bf16.mxu0 0
    %1283 = vmatpush1.bf16.msra.mxu0 %v1274
    %1284 = vmatprep.subr.bf16.mxu0 0
    %1285 = vmatpush1.bf16.msra.mxu0 0
    %1286 = vmatprep.subr.bf16.mxu0 0
    %1287 = vmatpush1.bf16.msra.mxu0 0
    %1288 = vmatprep.subr.bf16.mxu0 0
    %1289 = vmatpush1.bf16.msra.mxu0 0
    %1290 = vmatprep.subr.bf16.mxu0 0
    %1291 = vmatpush1.bf16.msra.mxu0 0
    %1292 = vmatprep.subr.bf16.mxu0 0
    %1293 = vmatpush1.bf16.msra.mxu0 0
    %1294 = vmatprep.subr.bf16.mxu0 0
    %1295 = vmatpush1.bf16.msra.mxu0 0
    %1296 = vmatprep.subr.bf16.mxu0 0
    %1297 = vmatpush1.bf16.msra.mxu0 0
    %1298 = vmatprep.subr.bf16.mxu0 0
    %1299 = vmatpush1.bf16.msra.mxu0 0
    %1300 = vmatprep.subr.bf16.mxu0 0
    %1301 = vmatpush1.bf16.msra.mxu0 0
    %1302 = vmatprep.subr.bf16.mxu0 0
    %1303 = vmatpush1.bf16.msra.mxu0 0
    %1304 = vmatprep.subr.bf16.mxu0 0
    %1305 = vmatpush1.bf16.msra.mxu0 0
    %1306 = vmatprep.subr.bf16.mxu0 0
    %1307 = vmatpush1.bf16.msra.mxu0 0
    %1308 = vmatprep.subr.bf16.mxu0 0
    %1309 = vmatpush1.bf16.msra.mxu0 0
    %1310 = vmatprep.subr.bf16.mxu0 0
    %1311 = vmatpush1.bf16.msra.mxu0 0
    %1312 = vmatprep.mubr.bf16.mxu0 0
    %1313 = vmatmul.mubr.bf16.gmra.mrb[0].mxu0 %v1278
    %v1314 = vpop.f32.mrb[0].mxu0
    %v1315 = vadd.f32 0.0, %v1314
    %v1316 = vpop.f32.mrb[0].mxu0
    %v1317 = vpop.f32.mrb[0].mxu0
    %v1318 = vadd.f32 0.0, %v1317
    %v1319 = vpop.f32.mrb[0].mxu0
    %1320 = vdwg.mxu0
    %v1325 = vunpack.c.l.b16 %v1149
    %v1326 = vunpack.c.l.b16 %v1150
    %v1327 = vunpack.c.l.b16 %v1151
    %v1328 = vunpack.c.l.b16 %v1152
    %v1329 = vpack.c.b16 %v1326, %v1325
    %v1330 = vpack.c.b16 %v1328, %v1327
    %v1334 = vsel %vm127, %v1136, 0
    %1336 = vmatprep.subr.bf16.mxu0 0
    %1337 = vmatpush1.bf16.msra.mxu0 %v1329
    %1338 = vmatprep.subr.bf16.mxu0 0
    %1339 = vmatpush1.bf16.msra.mxu0 %v1330
    %1340 = vmatprep.subr.bf16.mxu0 0
    %1341 = vmatpush1.bf16.msra.mxu0 0
    %1342 = vmatprep.subr.bf16.mxu0 0
    %1343 = vmatpush1.bf16.msra.mxu0 0
    %1344 = vmatprep.subr.bf16.mxu0 0
    %1345 = vmatpush1.bf16.msra.mxu0 0
    %1346 = vmatprep.subr.bf16.mxu0 0
    %1347 = vmatpush1.bf16.msra.mxu0 0
    %1348 = vmatprep.subr.bf16.mxu0 0
    %1349 = vmatpush1.bf16.msra.mxu0 0
    %1350 = vmatprep.subr.bf16.mxu0 0
    %1351 = vmatpush1.bf16.msra.mxu0 0
    %1352 = vmatprep.subr.bf16.mxu0 0
    %1353 = vmatpush1.bf16.msra.mxu0 0
    %1354 = vmatprep.subr.bf16.mxu0 0
    %1355 = vmatpush1.bf16.msra.mxu0 0
    %1356 = vmatprep.subr.bf16.mxu0 0
    %1357 = vmatpush1.bf16.msra.mxu0 0
    %1358 = vmatprep.subr.bf16.mxu0 0
    %1359 = vmatpush1.bf16.msra.mxu0 0
    %1360 = vmatprep.subr.bf16.mxu0 0
    %1361 = vmatpush1.bf16.msra.mxu0 0
    %1362 = vmatprep.subr.bf16.mxu0 0
    %1363 = vmatpush1.bf16.msra.mxu0 0
    %1364 = vmatprep.subr.bf16.mxu0 0
    %1365 = vmatpush1.bf16.msra.mxu0 0
    %1366 = vmatprep.subr.bf16.mxu0 0
    %1367 = vmatpush1.bf16.msra.mxu0 0
    %1368 = vmatprep.mubr.bf16.mxu0 0
    %1369 = vmatmul.mubr.bf16.gmra.mrb[0].mxu0 %v1334
    %v1370 = vpop.f32.mrb[0].mxu0
    %v1371 = vadd.f32 0.0, %v1370
    %v1372 = vpop.f32.mrb[0].mxu0
    %v1373 = vpop.f32.mrb[0].mxu0
    %v1374 = vadd.f32 0.0, %v1373
    %v1375 = vpop.f32.mrb[0].mxu0
    %1376 = vdwg.mxu0
    %v1377 = vsel %vm127, %v1203, 0.0
    %v1378 = vsel %vm127, %v1259, 0.0
    %v1379 = vadd.f32 %v1377, %v1378
    %v1380 = vsel %vm127, %v1315, 0.0
    %v1381 = vadd.f32 %v1379, %v1380
    %v1382 = vsel %vm127, %v1371, 0.0
    %v1383 = vadd.f32 %v1381, %v1382
    %v1384 = vsel %vm127, %v1206, 0.0
    %v1385 = vsel %vm127, %v1262, 0.0
    %v1386 = vadd.f32 %v1384, %v1385
    %v1387 = vsel %vm127, %v1318, 0.0
    %v1388 = vadd.f32 %v1386, %v1387
    %v1389 = vsel %vm127, %v1374, 0.0
    %v1390 = vadd.f32 %v1388, %v1389
    %v1391 = vld [vmem:[%s4] sm:$0x1]
    %v1393 = vlaneseq
    %v1394 = vshrl.u32 %v1393, 7
    %v1395 = vsub.s32 0, %v1394
    %v1396 = vrot.slane %v1391, %v1395
    %v1398 = vadd.f32 %v1383, %v1396
    %v1399 = vadd.f32 %v1390, %v1396
    %1400 = vst.msk [vmem:[#allocation8] sm:$0xff] %vm127, %v1398
    %1401 = vst.msk [vmem:[#allocation8 + $0x8] sm:$0xff] %vm127, %v1399
    // Predicated region
    $region34: #{tpu_custom_call.1} parent=1 // pred_check
      _
    $region35: #{tpu_custom_call.1} parent=1 // pred_check_branch
      %1403 = sbr.rel (0) target = $region37
    $region36: #{tpu_custom_call.1} parent=1 // pred_region
      %s1405 = ssub.s32 256, 256
      %1406 = vsyncadd [#allocation4], %s1405
      %s1407 = sshll.u32 [#allocation8], 4
      %s1408 = int_to_ptr.vmem [resolvable:$true] %s1407
      %1413 = dma.vmem_to_hbm [thread:$0]  %s1408, 256, %s5, [#allocation4], 128, 128, 8
    $region37: #{tpu_custom_call.1} parent=1 // pred_fallthru
      _
    // Predicated region
    $region38: #{tpu_custom_call.1} parent=1 // pred_check
      _
    $region39: #{tpu_custom_call.1} parent=1 // pred_check_branch
      %1415 = sbr.rel (0) target = $region41
    $region40: #{tpu_custom_call.1} parent=1 // pred_region
      %1416 = dma.done [#allocation4], 256
    $region41: #{tpu_custom_call.1} parent=1 // pred_fallthru
      _
    %1417 = vsyncpa [#allocation3], 1
    %1418 = vsyncpa [#allocation6], 1
    %1419 = vsyncpa [#allocation4], 1

</llo_original>
